<compile_context>
chip_gen: v7x
topology: tpu7x:2x2x1
jax: 0.10.0
libtpu: 0.0.40
codegen_flags: <defaults>
</compile_context>

<pallas_src>
import jax
import jax.numpy as jnp
from jax.experimental import pallas as pl
from jax.experimental.pallas import tpu as pltpu

HIDDEN = 50
IN_DIM = 3
OUT_DIM = 3
N_LAYERS = 9          # 8 hidden (tanh) + 1 output (no tanh)
PAD = 128             # lane/feature padding for the hidden width
LANE = 128            # batch tile must be a multiple of 128 (lane-dense blocks)
TM_MAX = 1024         # max batch tile (columns of the transposed activations)


def _round_up(a, b):
    return ((a + b - 1) // b) * b


def _cdiv(a, b):
    return -(-a // b)


def _device_flags():
    """bf16-tanh on v6e/v7x (f32 on v5e); 2 TensorCores on v7x, else 1."""
    try:
        kind = jax.devices()[0].device_kind.lower()
    except Exception:
        kind = ""
    use_bf16_tanh = "v5" not in kind          # v5e/v5p EUP/VPU have no bf16 path
    num_tc = 2 if ("v7" in kind or "tpu7" in kind or "7x" in kind) else 1
    return use_bf16_tanh, num_tc


_USE_BF16_TANH, _NUM_TC = _device_flags()


def _pick_tile(n, num_tc):
    """Batch tile tm (multiple of 128) and padded size; step count is a
    multiple of the TensorCore count so megacore sharding is balanced."""
    n_lanes = _round_up(max(n, 1), LANE)
    steps = _cdiv(n_lanes, TM_MAX)
    steps = _round_up(steps, num_tc)
    tm = _round_up(_cdiv(n_lanes, steps), LANE)
    n_pad = tm * steps
    return tm, n_pad, steps


def _make_kernel(bf16_tanh):
    def softmesh_kernel(xyz_ref, w0_ref, w_ref, b_ref, o_ref):
        # xyz_ref : (IN_DIM, TM) f32          lane-dense transposed coordinates
        # w0_ref  : (PAD, IN_DIM) f32         exact layer-0 weight columns
        # w_ref   : (N_LAYERS-1, PAD, PAD) bf16  layers 1..8 weights, pre-transposed (W^T)
        # b_ref   : (N_LAYERS, PAD, 1) f32    bias columns
        # o_ref   : (OUT_DIM, TM) f32         lane-dense output tile

        def act(pre):
            # bf16 tanh on v6e/v7x: EUP bf16 path + output already in the
            # dtype the next MXU dot consumes.  f32 tanh on v5e.
            return jnp.tanh(pre.astype(jnp.bfloat16)) if bf16_tanh else jnp.tanh(pre)

        # Layer 0 (K=3): three VPU outer-product FMAs with exact f32 weights
        # instead of a padded MXU matmul that would be 125/128 zeros.
        pre = (w0_ref[:, 0:1] * xyz_ref[0:1, :]
               + w0_ref[:, 1:2] * xyz_ref[1:2, :]
               + w0_ref[:, 2:3] * xyz_ref[2:3, :]
               + b_ref[0])
        h = act(pre)                                     # (PAD, TM)

        # Hidden layers 1..7: bf16 MXU dots, f32 accumulation, f32 bias add.
        for l in range(1, N_LAYERS - 1):
            pre = jnp.dot(w_ref[l - 1], h.astype(jnp.bfloat16),
                          preferred_element_type=jnp.float32) + b_ref[l]
            h = act(pre)

        # Output layer (no tanh); only the first OUT_DIM feature rows matter.
        pre = jnp.dot(w_ref[N_LAYERS - 2], h.astype(jnp.bfloat16),
                      preferred_element_type=jnp.float32) + b_ref[N_LAYERS - 1]
        o_ref[...] = pre[:OUT_DIM, :].astype(o_ref.dtype)

    return softmesh_kernel


@jax.jit
def softmesh_forward(x, y, z, w0_cols, wt_pad, b_pad):
    # x, y, z: (N, 1) float32
    n = x.shape[0]
    tm, n_pad, _ = _pick_tile(n, _NUM_TC)

    # Single fused, lane-dense (IN_DIM, N) input (one DMA per step).
    xyz = jnp.concatenate([x, y, z], axis=1).T            # (IN_DIM, N)
    if n_pad > n:
        xyz = jnp.pad(xyz, ((0, 0), (0, n_pad - n)))

    grid = (n_pad // tm,)
    out = pl.pallas_call(
        _make_kernel(_USE_BF16_TANH),
        out_shape=jax.ShapeDtypeStruct((OUT_DIM, n_pad), jnp.float32),
        grid_spec=pltpu.PrefetchScalarGridSpec(
            num_scalar_prefetch=0,
            grid=grid,
            in_specs=[
                pl.BlockSpec((IN_DIM, tm), lambda i: (0, i)),
                # Weights/biases: constant index_map -> fetched once, reused.
                pl.BlockSpec((PAD, IN_DIM), lambda i: (0, 0)),
                pl.BlockSpec((N_LAYERS - 1, PAD, PAD), lambda i: (0, 0, 0)),
                pl.BlockSpec((N_LAYERS, PAD, 1), lambda i: (0, 0, 0)),
            ],
            out_specs=pl.BlockSpec((OUT_DIM, tm), lambda i: (0, i)),
        ),
        compiler_params=pltpu.CompilerParams(
            dimension_semantics=("parallel",),
        ),
    )(xyz, w0_cols, wt_pad, b_pad)

    u = out[:, :n]                                        # (OUT_DIM, N)
    return u[0][:, None], u[1][:, None], u[2][:, None]


def init_params(key):
    """PyTorch nn.Linear default init: U(-1/sqrt(fan_in), 1/sqrt(fan_in))."""
    dims = [IN_DIM] + [HIDDEN] * 8 + [OUT_DIM]
    ws, bs = [], []
    for l in range(N_LAYERS):
        fan_in, fan_out = dims[l], dims[l + 1]
        key, kw, kb = jax.random.split(key, 3)
        bound = 1.0 / jnp.sqrt(fan_in)
        # stored as (fan_in, fan_out) so the module forward is x @ W + b
        ws.append(jax.random.uniform(kw, (fan_in, fan_out), jnp.float32,
                                     -bound, bound))
        bs.append(jax.random.uniform(kb, (fan_out,), jnp.float32,
                                     -bound, bound))
    return ws, bs


def pad_params(ws, bs):
    """Kernel-layout parameters:
      w0_cols : (PAD, IN_DIM) f32        exact layer-0 weight columns (W0^T)
      wt_pad  : (N_LAYERS-1, PAD, PAD) bf16  layers 1..8 transposed + zero-padded
      b_pad   : (N_LAYERS, PAD, 1) f32   zero-padded bias columns
    """
    w0_cols = jnp.zeros((PAD, IN_DIM), jnp.float32).at[:HIDDEN, :].set(ws[0].T)
    wt_pad = jnp.zeros((N_LAYERS - 1, PAD, PAD), jnp.float32)
    b_pad = jnp.zeros((N_LAYERS, PAD, 1), jnp.float32)
    b_pad = b_pad.at[0, :HIDDEN, 0].set(bs[0])
    for l in range(1, N_LAYERS):
        fi, fo = ws[l].shape
        wt_pad = wt_pad.at[l - 1, :fo, :fi].set(ws[l].T)
        b_pad = b_pad.at[l, :fo, 0].set(bs[l])
    return w0_cols, wt_pad.astype(jnp.bfloat16), b_pad


def reference_forward(x, y, z, ws, bs, *, match_kernel_precision=False,
                      bf16_tanh=False):
    """Pure-JAX reference.  match_kernel_precision=True mimics the kernel:
    exact f32 layer 0, bf16 weights / bf16 dot inputs with f32 accumulation
    for layers 1..8, and (optionally) tanh evaluated on bf16 pre-activations."""
    h = jnp.concatenate([x, y, z], axis=1)
    for l in range(N_LAYERS):
        w, b = ws[l], bs[l]
        if match_kernel_precision and l > 0:
            pre = jnp.dot(h.astype(jnp.bfloat16), w.astype(jnp.bfloat16),
                          preferred_element_type=jnp.float32) + b
        else:
            pre = jnp.dot(h.astype(jnp.float32), w, precision="highest") + b
        if l == N_LAYERS - 1:
            h = pre
        elif match_kernel_precision and bf16_tanh:
            h = jnp.tanh(pre.astype(jnp.bfloat16))
        else:
            h = jnp.tanh(pre)
    return h[:, 0:1], h[:, 1:2], h[:, 2:3]


if __name__ == "__main__":
    key = jax.random.PRNGKey(0)
    k_in, k_par = jax.random.split(key)
    kx, ky, kz = jax.random.split(k_in, 3)

    N = 100
    x = jax.random.normal(kx, (N, 1), jnp.float32)
    y = jax.random.normal(ky, (N, 1), jnp.float32)
    z = jax.random.normal(kz, (N, 1), jnp.float32)

    ws, bs = init_params(k_par)
    w0_cols, wt_pad, b_pad = pad_params(ws, bs)

    ux, uy, uz = softmesh_forward(x, y, z, w0_cols, wt_pad, b_pad)
    jax.block_until_ready((ux, uy, uz))

    assert ux.shape == (N, 1) and uy.shape == (N, 1) and uz.shape == (N, 1)

    # Tight check against a precision-matched reference (exact f32 layer 0,
    # bf16 dots with f32 accumulation, same tanh dtype as the kernel).
    mx, my, mz = reference_forward(x, y, z, ws, bs,
                                   match_kernel_precision=True,
                                   bf16_tanh=_USE_BF16_TANH)
    for got, ref in ((ux, mx), (uy, my), (uz, mz)):
        assert jnp.allclose(got, ref, atol=2e-2, rtol=2e-2), \
            float(jnp.max(jnp.abs(got - ref)))

    # Loose check against the full-f32 module semantics (bf16 compute adds
    # ~1e-2-level differences, hence the relaxed tolerance).
    rx, ry, rz = reference_forward(x, y, z, ws, bs)
    for got, ref in ((ux, rx), (uy, ry), (uz, rz)):
        assert jnp.allclose(got, ref, atol=5e-2, rtol=5e-2), \
            float(jnp.max(jnp.abs(got - ref)))

    print("KERNEL_OK")
</pallas_src>

<mosaic_0001>
module attributes {stable_mosaic.version = 11 : i64} {
  func.func @softmesh_kernel(%arg0: i32, %arg1: memref<3x128xf32, #tpu.memory_space<vmem>>, %arg2: memref<128x3xf32, #tpu.memory_space<vmem>>, %arg3: memref<8x128x128xbf16, #tpu.memory_space<vmem>>, %arg4: memref<9x128x1xf32, #tpu.memory_space<vmem>>, %arg5: memref<3x128xf32, #tpu.memory_space<vmem>>) attributes {dimension_semantics = [#tpu.dimension_semantics<parallel>], iteration_bounds = array<i64: 1>, scalar_prefetch = 0 : i64, scratch_operands = 0 : i64, tpu.core_type = #tpu.core_type<tc>, window_params = [{transform_indices = @transform_0, window_bounds = array<i64: 3, 128>}, {pipeline_mode = #tpu.pipeline_mode<synchronous>, transform_indices = @transform_1, window_bounds = array<i64: 128, 3>}, {pipeline_mode = #tpu.pipeline_mode<synchronous>, transform_indices = @transform_2, window_bounds = array<i64: 8, 128, 128>}, {pipeline_mode = #tpu.pipeline_mode<synchronous>, transform_indices = @transform_3, window_bounds = array<i64: 9, 128, 1>}, {transform_indices = @transform_4, window_bounds = array<i64: 3, 128>}]} {
    %c0 = arith.constant 0 : index
    %c0_0 = arith.constant 0 : index
    %0 = vector.load %arg2[%c0, %c0_0] : memref<128x3xf32, #tpu.memory_space<vmem>>, vector<128x1xf32>
    %c0_1 = arith.constant 0 : index
    %c0_2 = arith.constant 0 : index
    %1 = vector.load %arg1[%c0_1, %c0_2] : memref<3x128xf32, #tpu.memory_space<vmem>>, vector<1x128xf32>
    %2 = vector.broadcast %0 : vector<128x1xf32> to vector<128x128xf32>
    %3 = vector.broadcast %1 : vector<1x128xf32> to vector<128x128xf32>
    %4 = arith.mulf %2, %3 : vector<128x128xf32>
    %c0_3 = arith.constant 0 : index
    %c1 = arith.constant 1 : index
    %5 = vector.load %arg2[%c0_3, %c1] : memref<128x3xf32, #tpu.memory_space<vmem>>, vector<128x1xf32>
    %c1_4 = arith.constant 1 : index
    %c0_5 = arith.constant 0 : index
    %6 = vector.load %arg1[%c1_4, %c0_5] : memref<3x128xf32, #tpu.memory_space<vmem>>, vector<1x128xf32>
    %7 = vector.broadcast %5 : vector<128x1xf32> to vector<128x128xf32>
    %8 = vector.broadcast %6 : vector<1x128xf32> to vector<128x128xf32>
    %9 = arith.mulf %7, %8 : vector<128x128xf32>
    %10 = arith.addf %4, %9 : vector<128x128xf32>
    %c0_6 = arith.constant 0 : index
    %c2 = arith.constant 2 : index
    %11 = vector.load %arg2[%c0_6, %c2] : memref<128x3xf32, #tpu.memory_space<vmem>>, vector<128x1xf32>
    %c2_7 = arith.constant 2 : index
    %c0_8 = arith.constant 0 : index
    %12 = vector.load %arg1[%c2_7, %c0_8] : memref<3x128xf32, #tpu.memory_space<vmem>>, vector<1x128xf32>
    %13 = vector.broadcast %11 : vector<128x1xf32> to vector<128x128xf32>
    %14 = vector.broadcast %12 : vector<1x128xf32> to vector<128x128xf32>
    %15 = arith.mulf %13, %14 : vector<128x128xf32>
    %16 = arith.addf %10, %15 : vector<128x128xf32>
    %c0_9 = arith.constant 0 : index
    %c0_10 = arith.constant 0 : index
    %c0_11 = arith.constant 0 : index
    %17 = vector.load %arg4[%c0_9, %c0_10, %c0_11] : memref<9x128x1xf32, #tpu.memory_space<vmem>>, vector<1x128x1xf32>
    %18 = vector.shape_cast %17 : vector<1x128x1xf32> to vector<128x1xf32>
    %19 = vector.broadcast %18 : vector<128x1xf32> to vector<128x128xf32>
    %20 = arith.addf %16, %19 : vector<128x128xf32>
    %21 = arith.truncf %20 : vector<128x128xf32> to vector<128x128xbf16>
    %22 = math.tanh %21 : vector<128x128xbf16>
    %c0_12 = arith.constant 0 : index
    %c0_13 = arith.constant 0 : index
    %c0_14 = arith.constant 0 : index
    %23 = vector.load %arg3[%c0_12, %c0_13, %c0_14] : memref<8x128x128xbf16, #tpu.memory_space<vmem>>, vector<1x128x128xbf16>
    %24 = vector.shape_cast %23 : vector<1x128x128xbf16> to vector<128x128xbf16>
    %cst = arith.constant dense<0.000000e+00> : vector<128x128xf32>
    %25 = tpu.matmul %24, %22, %cst {dimension_numbers = #tpu.dot_dimension_numbers<[1], [0], [0], [1], [0, 0, 1, 1], [], []>} : vector<128x128xbf16>, vector<128x128xbf16>, vector<128x128xf32> -> vector<128x128xf32>
    %c1_15 = arith.constant 1 : index
    %c0_16 = arith.constant 0 : index
    %c0_17 = arith.constant 0 : index
    %26 = vector.load %arg4[%c1_15, %c0_16, %c0_17] : memref<9x128x1xf32, #tpu.memory_space<vmem>>, vector<1x128x1xf32>
    %27 = vector.shape_cast %26 : vector<1x128x1xf32> to vector<128x1xf32>
    %28 = vector.broadcast %27 : vector<128x1xf32> to vector<128x128xf32>
    %29 = arith.addf %25, %28 : vector<128x128xf32>
    %30 = arith.truncf %29 : vector<128x128xf32> to vector<128x128xbf16>
    %31 = math.tanh %30 : vector<128x128xbf16>
    %c1_18 = arith.constant 1 : index
    %c0_19 = arith.constant 0 : index
    %c0_20 = arith.constant 0 : index
    %32 = vector.load %arg3[%c1_18, %c0_19, %c0_20] : memref<8x128x128xbf16, #tpu.memory_space<vmem>>, vector<1x128x128xbf16>
    %33 = vector.shape_cast %32 : vector<1x128x128xbf16> to vector<128x128xbf16>
    %cst_21 = arith.constant dense<0.000000e+00> : vector<128x128xf32>
    %34 = tpu.matmul %33, %31, %cst_21 {dimension_numbers = #tpu.dot_dimension_numbers<[1], [0], [0], [1], [0, 0, 1, 1], [], []>} : vector<128x128xbf16>, vector<128x128xbf16>, vector<128x128xf32> -> vector<128x128xf32>
    %c2_22 = arith.constant 2 : index
    %c0_23 = arith.constant 0 : index
    %c0_24 = arith.constant 0 : index
    %35 = vector.load %arg4[%c2_22, %c0_23, %c0_24] : memref<9x128x1xf32, #tpu.memory_space<vmem>>, vector<1x128x1xf32>
    %36 = vector.shape_cast %35 : vector<1x128x1xf32> to vector<128x1xf32>
    %37 = vector.broadcast %36 : vector<128x1xf32> to vector<128x128xf32>
    %38 = arith.addf %34, %37 : vector<128x128xf32>
    %39 = arith.truncf %38 : vector<128x128xf32> to vector<128x128xbf16>
    %40 = math.tanh %39 : vector<128x128xbf16>
    %c2_25 = arith.constant 2 : index
    %c0_26 = arith.constant 0 : index
    %c0_27 = arith.constant 0 : index
    %41 = vector.load %arg3[%c2_25, %c0_26, %c0_27] : memref<8x128x128xbf16, #tpu.memory_space<vmem>>, vector<1x128x128xbf16>
    %42 = vector.shape_cast %41 : vector<1x128x128xbf16> to vector<128x128xbf16>
    %cst_28 = arith.constant dense<0.000000e+00> : vector<128x128xf32>
    %43 = tpu.matmul %42, %40, %cst_28 {dimension_numbers = #tpu.dot_dimension_numbers<[1], [0], [0], [1], [0, 0, 1, 1], [], []>} : vector<128x128xbf16>, vector<128x128xbf16>, vector<128x128xf32> -> vector<128x128xf32>
    %c3 = arith.constant 3 : index
    %c0_29 = arith.constant 0 : index
    %c0_30 = arith.constant 0 : index
    %44 = vector.load %arg4[%c3, %c0_29, %c0_30] : memref<9x128x1xf32, #tpu.memory_space<vmem>>, vector<1x128x1xf32>
    %45 = vector.shape_cast %44 : vector<1x128x1xf32> to vector<128x1xf32>
    %46 = vector.broadcast %45 : vector<128x1xf32> to vector<128x128xf32>
    %47 = arith.addf %43, %46 : vector<128x128xf32>
    %48 = arith.truncf %47 : vector<128x128xf32> to vector<128x128xbf16>
    %49 = math.tanh %48 : vector<128x128xbf16>
    %c3_31 = arith.constant 3 : index
    %c0_32 = arith.constant 0 : index
    %c0_33 = arith.constant 0 : index
    %50 = vector.load %arg3[%c3_31, %c0_32, %c0_33] : memref<8x128x128xbf16, #tpu.memory_space<vmem>>, vector<1x128x128xbf16>
    %51 = vector.shape_cast %50 : vector<1x128x128xbf16> to vector<128x128xbf16>
    %cst_34 = arith.constant dense<0.000000e+00> : vector<128x128xf32>
    %52 = tpu.matmul %51, %49, %cst_34 {dimension_numbers = #tpu.dot_dimension_numbers<[1], [0], [0], [1], [0, 0, 1, 1], [], []>} : vector<128x128xbf16>, vector<128x128xbf16>, vector<128x128xf32> -> vector<128x128xf32>
    %c4 = arith.constant 4 : index
    %c0_35 = arith.constant 0 : index
    %c0_36 = arith.constant 0 : index
    %53 = vector.load %arg4[%c4, %c0_35, %c0_36] : memref<9x128x1xf32, #tpu.memory_space<vmem>>, vector<1x128x1xf32>
    %54 = vector.shape_cast %53 : vector<1x128x1xf32> to vector<128x1xf32>
    %55 = vector.broadcast %54 : vector<128x1xf32> to vector<128x128xf32>
    %56 = arith.addf %52, %55 : vector<128x128xf32>
    %57 = arith.truncf %56 : vector<128x128xf32> to vector<128x128xbf16>
    %58 = math.tanh %57 : vector<128x128xbf16>
    %c4_37 = arith.constant 4 : index
    %c0_38 = arith.constant 0 : index
    %c0_39 = arith.constant 0 : index
    %59 = vector.load %arg3[%c4_37, %c0_38, %c0_39] : memref<8x128x128xbf16, #tpu.memory_space<vmem>>, vector<1x128x128xbf16>
    %60 = vector.shape_cast %59 : vector<1x128x128xbf16> to vector<128x128xbf16>
    %cst_40 = arith.constant dense<0.000000e+00> : vector<128x128xf32>
    %61 = tpu.matmul %60, %58, %cst_40 {dimension_numbers = #tpu.dot_dimension_numbers<[1], [0], [0], [1], [0, 0, 1, 1], [], []>} : vector<128x128xbf16>, vector<128x128xbf16>, vector<128x128xf32> -> vector<128x128xf32>
    %c5 = arith.constant 5 : index
    %c0_41 = arith.constant 0 : index
    %c0_42 = arith.constant 0 : index
    %62 = vector.load %arg4[%c5, %c0_41, %c0_42] : memref<9x128x1xf32, #tpu.memory_space<vmem>>, vector<1x128x1xf32>
    %63 = vector.shape_cast %62 : vector<1x128x1xf32> to vector<128x1xf32>
    %64 = vector.broadcast %63 : vector<128x1xf32> to vector<128x128xf32>
    %65 = arith.addf %61, %64 : vector<128x128xf32>
    %66 = arith.truncf %65 : vector<128x128xf32> to vector<128x128xbf16>
    %67 = math.tanh %66 : vector<128x128xbf16>
    %c5_43 = arith.constant 5 : index
    %c0_44 = arith.constant 0 : index
    %c0_45 = arith.constant 0 : index
    %68 = vector.load %arg3[%c5_43, %c0_44, %c0_45] : memref<8x128x128xbf16, #tpu.memory_space<vmem>>, vector<1x128x128xbf16>
    %69 = vector.shape_cast %68 : vector<1x128x128xbf16> to vector<128x128xbf16>
    %cst_46 = arith.constant dense<0.000000e+00> : vector<128x128xf32>
    %70 = tpu.matmul %69, %67, %cst_46 {dimension_numbers = #tpu.dot_dimension_numbers<[1], [0], [0], [1], [0, 0, 1, 1], [], []>} : vector<128x128xbf16>, vector<128x128xbf16>, vector<128x128xf32> -> vector<128x128xf32>
    %c6 = arith.constant 6 : index
    %c0_47 = arith.constant 0 : index
    %c0_48 = arith.constant 0 : index
    %71 = vector.load %arg4[%c6, %c0_47, %c0_48] : memref<9x128x1xf32, #tpu.memory_space<vmem>>, vector<1x128x1xf32>
    %72 = vector.shape_cast %71 : vector<1x128x1xf32> to vector<128x1xf32>
    %73 = vector.broadcast %72 : vector<128x1xf32> to vector<128x128xf32>
    %74 = arith.addf %70, %73 : vector<128x128xf32>
    %75 = arith.truncf %74 : vector<128x128xf32> to vector<128x128xbf16>
    %76 = math.tanh %75 : vector<128x128xbf16>
    %c6_49 = arith.constant 6 : index
    %c0_50 = arith.constant 0 : index
    %c0_51 = arith.constant 0 : index
    %77 = vector.load %arg3[%c6_49, %c0_50, %c0_51] : memref<8x128x128xbf16, #tpu.memory_space<vmem>>, vector<1x128x128xbf16>
    %78 = vector.shape_cast %77 : vector<1x128x128xbf16> to vector<128x128xbf16>
    %cst_52 = arith.constant dense<0.000000e+00> : vector<128x128xf32>
    %79 = tpu.matmul %78, %76, %cst_52 {dimension_numbers = #tpu.dot_dimension_numbers<[1], [0], [0], [1], [0, 0, 1, 1], [], []>} : vector<128x128xbf16>, vector<128x128xbf16>, vector<128x128xf32> -> vector<128x128xf32>
    %c7 = arith.constant 7 : index
    %c0_53 = arith.constant 0 : index
    %c0_54 = arith.constant 0 : index
    %80 = vector.load %arg4[%c7, %c0_53, %c0_54] : memref<9x128x1xf32, #tpu.memory_space<vmem>>, vector<1x128x1xf32>
    %81 = vector.shape_cast %80 : vector<1x128x1xf32> to vector<128x1xf32>
    %82 = vector.broadcast %81 : vector<128x1xf32> to vector<128x128xf32>
    %83 = arith.addf %79, %82 : vector<128x128xf32>
    %84 = arith.truncf %83 : vector<128x128xf32> to vector<128x128xbf16>
    %85 = math.tanh %84 : vector<128x128xbf16>
    %c7_55 = arith.constant 7 : index
    %c0_56 = arith.constant 0 : index
    %c0_57 = arith.constant 0 : index
    %86 = vector.load %arg3[%c7_55, %c0_56, %c0_57] : memref<8x128x128xbf16, #tpu.memory_space<vmem>>, vector<1x128x128xbf16>
    %87 = vector.shape_cast %86 : vector<1x128x128xbf16> to vector<128x128xbf16>
    %cst_58 = arith.constant dense<0.000000e+00> : vector<128x128xf32>
    %88 = tpu.matmul %87, %85, %cst_58 {dimension_numbers = #tpu.dot_dimension_numbers<[1], [0], [0], [1], [0, 0, 1, 1], [], []>} : vector<128x128xbf16>, vector<128x128xbf16>, vector<128x128xf32> -> vector<128x128xf32>
    %c8 = arith.constant 8 : index
    %c0_59 = arith.constant 0 : index
    %c0_60 = arith.constant 0 : index
    %89 = vector.load %arg4[%c8, %c0_59, %c0_60] : memref<9x128x1xf32, #tpu.memory_space<vmem>>, vector<1x128x1xf32>
    %90 = vector.shape_cast %89 : vector<1x128x1xf32> to vector<128x1xf32>
    %91 = vector.broadcast %90 : vector<128x1xf32> to vector<128x128xf32>
    %92 = arith.addf %88, %91 : vector<128x128xf32>
    %93 = vector.extract_strided_slice %92 {offsets = [0, 0], sizes = [3, 128], strides = [1, 1]} : vector<128x128xf32> to vector<3x128xf32>
    %c0_61 = arith.constant 0 : index
    %c0_62 = arith.constant 0 : index
    %94 = vector.load %arg5[%c0_61, %c0_62] : memref<3x128xf32, #tpu.memory_space<vmem>>, vector<3x128xf32>
    tpu.vector_store %arg5[%c0_61, %c0_62], %93 {strides = array<i32>} : memref<3x128xf32, #tpu.memory_space<vmem>>, vector<3x128xf32>,
    return
  }
  func.func @transform_0(%arg0: i32) -> (i32, i32) {
    %c0_i32 = arith.constant 0 : i32
    %c0_i32_0 = arith.constant 0 : i32
    return %c0_i32, %arg0 : i32, i32
  }
  func.func @transform_1(%arg0: i32) -> (i32, i32) {
    %c0_i32 = arith.constant 0 : i32
    %c0_i32_0 = arith.constant 0 : i32
    %c0_i32_1 = arith.constant 0 : i32
    return %c0_i32, %c0_i32_0 : i32, i32
  }
  func.func @transform_2(%arg0: i32) -> (i32, i32, i32) {
    %c0_i32 = arith.constant 0 : i32
    %c0_i32_0 = arith.constant 0 : i32
    %c0_i32_1 = arith.constant 0 : i32
    %c0_i32_2 = arith.constant 0 : i32
    return %c0_i32, %c0_i32_0, %c0_i32_1 : i32, i32, i32
  }
  func.func @transform_3(%arg0: i32) -> (i32, i32, i32) {
    %c0_i32 = arith.constant 0 : i32
    %c0_i32_0 = arith.constant 0 : i32
    %c0_i32_1 = arith.constant 0 : i32
    %c0_i32_2 = arith.constant 0 : i32
    return %c0_i32, %c0_i32_0, %c0_i32_1 : i32, i32, i32
  }
  func.func @transform_4(%arg0: i32) -> (i32, i32) {
    %c0_i32 = arith.constant 0 : i32
    %c0_i32_0 = arith.constant 0 : i32
    return %c0_i32, %arg0 : i32, i32
  }
}

</mosaic_0001>

<llo_original>
// kernel: softmesh_forward.1
$region0: #{softmesh_forward.1}
  #allocation0 [shape = 'u32[]', space=smem, size = 0x4, offset = 0x4, fixed_abs, tag = 'smem constant byte address 0x4 - core index']
  #allocation1 [shape = 'u32[144,128]{1,0:T(1,128)}', space=vmem, size = 0x12000, scoped, tag = 'internal scratch']
  %s0 = inlined_call_operand.vmem [shape: f32[3,128], index: 0, kind: input, shape index: {}]
  %s1 = inlined_call_operand.vmem [shape: f32[128,3], index: 1, kind: input, shape index: {}]
  %s2 = inlined_call_operand.vmem [shape: bf16[8,128,128], index: 2, kind: input, shape index: {}]
  %s3 = inlined_call_operand.vmem [shape: f32[9,128,1], index: 3, kind: input, shape index: {}]
  %s4 = inlined_call_operand.vmem [shape: f32[3,128], index: 4, kind: output, shape index: {}]
  %s5 = sld [smem:[#allocation0]]
  $region26: #{softmesh_forward.1} parent=0
    _
  %s7 = ssub.s32 1, %s5
  %s8 = scalar_select 0, %s7, %s5
  // Predicated region
  $region2: #{softmesh_forward.1} parent=0 // pred_check
    _
  $region3: #{softmesh_forward.1} parent=0 // pred_check_branch
    %10 = sbr.rel (0) target = $region5
  $region4: #{softmesh_forward.1} parent=0 // pred_region
    _
  $region5: #{softmesh_forward.1} parent=0 // pred_fallthru
    _
  // Predicated region
  $region6: #{softmesh_forward.1} parent=0 // pred_check
    _
  $region7: #{softmesh_forward.1} parent=0 // pred_check_branch
    %12 = sbr.rel (0) target = $region9
  $region8: #{softmesh_forward.1} parent=0 // pred_region
    _
  $region9: #{softmesh_forward.1} parent=0 // pred_fallthru
    _
  // Predicated region
  $region10: #{softmesh_forward.1} parent=0 // pred_check
    _
  $region11: #{softmesh_forward.1} parent=0 // pred_check_branch
    %14 = sbr.rel (0) target = $region13
  $region12: #{softmesh_forward.1} parent=0 // pred_region
    _
  $region13: #{softmesh_forward.1} parent=0 // pred_fallthru
    _
  // Predicated region
  $region14: #{softmesh_forward.1} parent=0 // pred_check
    _
  $region15: #{softmesh_forward.1} parent=0 // pred_check_branch
    %16 = sbr.rel (0) target = $region17
  $region16: #{softmesh_forward.1} parent=0 // pred_region
    _
  $region17: #{softmesh_forward.1} parent=0 // pred_fallthru
    _
  %v18 = vld [vmem:[%s1] sm:$0xff]
  %v19 = vld [vmem:[%s1 + $0x8] sm:$0xff]
  %v20 = vld [vmem:[%s1 + $0x10] sm:$0xff]
  %v21 = vld [vmem:[%s1 + $0x18] sm:$0xff]
  %v22 = vld [vmem:[%s1 + $0x20] sm:$0xff]
  %v23 = vld [vmem:[%s1 + $0x28] sm:$0xff]
  %v24 = vld [vmem:[%s1 + $0x30] sm:$0xff]
  %v25 = vld [vmem:[%s1 + $0x38] sm:$0xff]
  %v26 = vld [vmem:[%s1 + $0x40] sm:$0xff]
  %v27 = vld [vmem:[%s1 + $0x48] sm:$0xff]
  %v28 = vld [vmem:[%s1 + $0x50] sm:$0xff]
  %v29 = vld [vmem:[%s1 + $0x58] sm:$0xff]
  %v30 = vld [vmem:[%s1 + $0x60] sm:$0xff]
  %v31 = vld [vmem:[%s1 + $0x68] sm:$0xff]
  %v32 = vld [vmem:[%s1 + $0x70] sm:$0xff]
  %v33 = vld [vmem:[%s1 + $0x78] sm:$0xff]
  %v34 = vld [vmem:[%s0] sm:$0x1]
  %36 = vset.pattern.permute.xlu0 0
  %37 = vperm.xlu0 %36, %v18
  %v38 = vpop.permute.xlu0 %37
  %41 = vset.pattern.permute.xlu0 0
  %42 = vperm.xlu0 %41, %v19
  %v43 = vpop.permute.xlu0 %42
  %46 = vset.pattern.permute.xlu0 0
  %47 = vperm.xlu0 %46, %v20
  %v48 = vpop.permute.xlu0 %47
  %51 = vset.pattern.permute.xlu0 0
  %52 = vperm.xlu0 %51, %v21
  %v53 = vpop.permute.xlu0 %52
  %56 = vset.pattern.permute.xlu0 0
  %57 = vperm.xlu0 %56, %v22
  %v58 = vpop.permute.xlu0 %57
  %61 = vset.pattern.permute.xlu0 0
  %62 = vperm.xlu0 %61, %v23
  %v63 = vpop.permute.xlu0 %62
  %66 = vset.pattern.permute.xlu0 0
  %67 = vperm.xlu0 %66, %v24
  %v68 = vpop.permute.xlu0 %67
  %71 = vset.pattern.permute.xlu0 0
  %72 = vperm.xlu0 %71, %v25
  %v73 = vpop.permute.xlu0 %72
  %76 = vset.pattern.permute.xlu0 0
  %77 = vperm.xlu0 %76, %v26
  %v78 = vpop.permute.xlu0 %77
  %81 = vset.pattern.permute.xlu0 0
  %82 = vperm.xlu0 %81, %v27
  %v83 = vpop.permute.xlu0 %82
  %86 = vset.pattern.permute.xlu0 0
  %87 = vperm.xlu0 %86, %v28
  %v88 = vpop.permute.xlu0 %87
  %91 = vset.pattern.permute.xlu0 0
  %92 = vperm.xlu0 %91, %v29
  %v93 = vpop.permute.xlu0 %92
  %96 = vset.pattern.permute.xlu0 0
  %97 = vperm.xlu0 %96, %v30
  %v98 = vpop.permute.xlu0 %97
  %101 = vset.pattern.permute.xlu0 0
  %102 = vperm.xlu0 %101, %v31
  %v103 = vpop.permute.xlu0 %102
  %106 = vset.pattern.permute.xlu0 0
  %107 = vperm.xlu0 %106, %v32
  %v108 = vpop.permute.xlu0 %107
  %111 = vset.pattern.permute.xlu0 0
  %112 = vperm.xlu0 %111, %v33
  %v113 = vpop.permute.xlu0 %112
  %v115 = vlaneseq
  %v116 = vshrl.u32 %v115, 7
  %v117 = vsub.s32 0, %v116
  %v118 = vrot.slane %v34, %v117
  %v119 = vmul.f32 %v38, %v118
  %v120 = vmul.f32 %v43, %v118
  %v121 = vmul.f32 %v48, %v118
  %v122 = vmul.f32 %v53, %v118
  %v123 = vmul.f32 %v58, %v118
  %v124 = vmul.f32 %v63, %v118
  %v125 = vmul.f32 %v68, %v118
  %v126 = vmul.f32 %v73, %v118
  %v127 = vmul.f32 %v78, %v118
  %v128 = vmul.f32 %v83, %v118
  %v129 = vmul.f32 %v88, %v118
  %v130 = vmul.f32 %v93, %v118
  %v131 = vmul.f32 %v98, %v118
  %v132 = vmul.f32 %v103, %v118
  %v133 = vmul.f32 %v108, %v118
  %v134 = vmul.f32 %v113, %v118
  %v135 = vld [vmem:[%s0 + $0x1] sm:$0x1]
  %136 = vset.pattern.permute.xlu0 1
  %137 = vperm.xlu0 %136, %v18
  %v138 = vpop.permute.xlu0 %137
  %140 = vset.pattern.permute.xlu0 1
  %141 = vperm.xlu0 %140, %v19
  %v142 = vpop.permute.xlu0 %141
  %144 = vset.pattern.permute.xlu0 1
  %145 = vperm.xlu0 %144, %v20
  %v146 = vpop.permute.xlu0 %145
  %148 = vset.pattern.permute.xlu0 1
  %149 = vperm.xlu0 %148, %v21
  %v150 = vpop.permute.xlu0 %149
  %152 = vset.pattern.permute.xlu0 1
  %153 = vperm.xlu0 %152, %v22
  %v154 = vpop.permute.xlu0 %153
  %156 = vset.pattern.permute.xlu0 1
  %157 = vperm.xlu0 %156, %v23
  %v158 = vpop.permute.xlu0 %157
  %160 = vset.pattern.permute.xlu0 1
  %161 = vperm.xlu0 %160, %v24
  %v162 = vpop.permute.xlu0 %161
  %164 = vset.pattern.permute.xlu0 1
  %165 = vperm.xlu0 %164, %v25
  %v166 = vpop.permute.xlu0 %165
  %168 = vset.pattern.permute.xlu0 1
  %169 = vperm.xlu0 %168, %v26
  %v170 = vpop.permute.xlu0 %169
  %172 = vset.pattern.permute.xlu0 1
  %173 = vperm.xlu0 %172, %v27
  %v174 = vpop.permute.xlu0 %173
  %176 = vset.pattern.permute.xlu0 1
  %177 = vperm.xlu0 %176, %v28
  %v178 = vpop.permute.xlu0 %177
  %180 = vset.pattern.permute.xlu0 1
  %181 = vperm.xlu0 %180, %v29
  %v182 = vpop.permute.xlu0 %181
  %184 = vset.pattern.permute.xlu0 1
  %185 = vperm.xlu0 %184, %v30
  %v186 = vpop.permute.xlu0 %185
  %188 = vset.pattern.permute.xlu0 1
  %189 = vperm.xlu0 %188, %v31
  %v190 = vpop.permute.xlu0 %189
  %192 = vset.pattern.permute.xlu0 1
  %193 = vperm.xlu0 %192, %v32
  %v194 = vpop.permute.xlu0 %193
  %196 = vset.pattern.permute.xlu0 1
  %197 = vperm.xlu0 %196, %v33
  %v198 = vpop.permute.xlu0 %197
  %v200 = vlaneseq
  %v201 = vshrl.u32 %v200, 7
  %v202 = vsub.s32 0, %v201
  %v203 = vrot.slane %v135, %v202
  %v204 = vmul.f32 %v138, %v203
  %v205 = vmul.f32 %v142, %v203
  %v206 = vmul.f32 %v146, %v203
  %v207 = vmul.f32 %v150, %v203
  %v208 = vmul.f32 %v154, %v203
  %v209 = vmul.f32 %v158, %v203
  %v210 = vmul.f32 %v162, %v203
  %v211 = vmul.f32 %v166, %v203
  %v212 = vmul.f32 %v170, %v203
  %v213 = vmul.f32 %v174, %v203
  %v214 = vmul.f32 %v178, %v203
  %v215 = vmul.f32 %v182, %v203
  %v216 = vmul.f32 %v186, %v203
  %v217 = vmul.f32 %v190, %v203
  %v218 = vmul.f32 %v194, %v203
  %v219 = vmul.f32 %v198, %v203
  %v220 = vadd.f32 %v119, %v204
  %v221 = vadd.f32 %v120, %v205
  %v222 = vadd.f32 %v121, %v206
  %v223 = vadd.f32 %v122, %v207
  %v224 = vadd.f32 %v123, %v208
  %v225 = vadd.f32 %v124, %v209
  %v226 = vadd.f32 %v125, %v210
  %v227 = vadd.f32 %v126, %v211
  %v228 = vadd.f32 %v127, %v212
  %v229 = vadd.f32 %v128, %v213
  %v230 = vadd.f32 %v129, %v214
  %v231 = vadd.f32 %v130, %v215
  %v232 = vadd.f32 %v131, %v216
  %v233 = vadd.f32 %v132, %v217
  %v234 = vadd.f32 %v133, %v218
  %v235 = vadd.f32 %v134, %v219
  %v236 = vld [vmem:[%s0 + $0x2] sm:$0x1]
  %237 = vset.pattern.permute.xlu0 2
  %238 = vperm.xlu0 %237, %v18
  %v239 = vpop.permute.xlu0 %238
  %241 = vset.pattern.permute.xlu0 2
  %242 = vperm.xlu0 %241, %v19
  %v243 = vpop.permute.xlu0 %242
  %245 = vset.pattern.permute.xlu0 2
  %246 = vperm.xlu0 %245, %v20
  %v247 = vpop.permute.xlu0 %246
  %249 = vset.pattern.permute.xlu0 2
  %250 = vperm.xlu0 %249, %v21
  %v251 = vpop.permute.xlu0 %250
  %253 = vset.pattern.permute.xlu0 2
  %254 = vperm.xlu0 %253, %v22
  %v255 = vpop.permute.xlu0 %254
  %257 = vset.pattern.permute.xlu0 2
  %258 = vperm.xlu0 %257, %v23
  %v259 = vpop.permute.xlu0 %258
  %261 = vset.pattern.permute.xlu0 2
  %262 = vperm.xlu0 %261, %v24
  %v263 = vpop.permute.xlu0 %262
  %265 = vset.pattern.permute.xlu0 2
  %266 = vperm.xlu0 %265, %v25
  %v267 = vpop.permute.xlu0 %266
  %269 = vset.pattern.permute.xlu0 2
  %270 = vperm.xlu0 %269, %v26
  %v271 = vpop.permute.xlu0 %270
  %273 = vset.pattern.permute.xlu0 2
  %274 = vperm.xlu0 %273, %v27
  %v275 = vpop.permute.xlu0 %274
  %277 = vset.pattern.permute.xlu0 2
  %278 = vperm.xlu0 %277, %v28
  %v279 = vpop.permute.xlu0 %278
  %281 = vset.pattern.permute.xlu0 2
  %282 = vperm.xlu0 %281, %v29
  %v283 = vpop.permute.xlu0 %282
  %285 = vset.pattern.permute.xlu0 2
  %286 = vperm.xlu0 %285, %v30
  %v287 = vpop.permute.xlu0 %286
  %289 = vset.pattern.permute.xlu0 2
  %290 = vperm.xlu0 %289, %v31
  %v291 = vpop.permute.xlu0 %290
  %293 = vset.pattern.permute.xlu0 2
  %294 = vperm.xlu0 %293, %v32
  %v295 = vpop.permute.xlu0 %294
  %297 = vset.pattern.permute.xlu0 2
  %298 = vperm.xlu0 %297, %v33
  %v299 = vpop.permute.xlu0 %298
  %v301 = vlaneseq
  %v302 = vshrl.u32 %v301, 7
  %v303 = vsub.s32 0, %v302
  %v304 = vrot.slane %v236, %v303
  %v305 = vmul.f32 %v239, %v304
  %v306 = vmul.f32 %v243, %v304
  %v307 = vmul.f32 %v247, %v304
  %v308 = vmul.f32 %v251, %v304
  %v309 = vmul.f32 %v255, %v304
  %v310 = vmul.f32 %v259, %v304
  %v311 = vmul.f32 %v263, %v304
  %v312 = vmul.f32 %v267, %v304
  %v313 = vmul.f32 %v271, %v304
  %v314 = vmul.f32 %v275, %v304
  %v315 = vmul.f32 %v279, %v304
  %v316 = vmul.f32 %v283, %v304
  %v317 = vmul.f32 %v287, %v304
  %v318 = vmul.f32 %v291, %v304
  %v319 = vmul.f32 %v295, %v304
  %v320 = vmul.f32 %v299, %v304
  %v321 = vadd.f32 %v220, %v305
  %v322 = vadd.f32 %v221, %v306
  %v323 = vadd.f32 %v222, %v307
  %v324 = vadd.f32 %v223, %v308
  %v325 = vadd.f32 %v224, %v309
  %v326 = vadd.f32 %v225, %v310
  %v327 = vadd.f32 %v226, %v311
  %v328 = vadd.f32 %v227, %v312
  %v329 = vadd.f32 %v228, %v313
  %v330 = vadd.f32 %v229, %v314
  %v331 = vadd.f32 %v230, %v315
  %v332 = vadd.f32 %v231, %v316
  %v333 = vadd.f32 %v232, %v317
  %v334 = vadd.f32 %v233, %v318
  %v335 = vadd.f32 %v234, %v319
  %v336 = vadd.f32 %v235, %v320
  %v337 = vld [vmem:[%s3] sm:$0xff]
  %v338 = vld [vmem:[%s3 + $0x8] sm:$0xff]
  %v339 = vld [vmem:[%s3 + $0x10] sm:$0xff]
  %v340 = vld [vmem:[%s3 + $0x18] sm:$0xff]
  %v341 = vld [vmem:[%s3 + $0x20] sm:$0xff]
  %v342 = vld [vmem:[%s3 + $0x28] sm:$0xff]
  %v343 = vld [vmem:[%s3 + $0x30] sm:$0xff]
  %v344 = vld [vmem:[%s3 + $0x38] sm:$0xff]
  %v345 = vld [vmem:[%s3 + $0x40] sm:$0xff]
  %v346 = vld [vmem:[%s3 + $0x48] sm:$0xff]
  %v347 = vld [vmem:[%s3 + $0x50] sm:$0xff]
  %v348 = vld [vmem:[%s3 + $0x58] sm:$0xff]
  %v349 = vld [vmem:[%s3 + $0x60] sm:$0xff]
  %v350 = vld [vmem:[%s3 + $0x68] sm:$0xff]
  %v351 = vld [vmem:[%s3 + $0x70] sm:$0xff]
  %v352 = vld [vmem:[%s3 + $0x78] sm:$0xff]
  %354 = vset.pattern.permute.xlu0 0
  %355 = vperm.xlu0 %354, %v337
  %v356 = vpop.permute.xlu0 %355
  %359 = vset.pattern.permute.xlu0 0
  %360 = vperm.xlu0 %359, %v338
  %v361 = vpop.permute.xlu0 %360
  %364 = vset.pattern.permute.xlu0 0
  %365 = vperm.xlu0 %364, %v339
  %v366 = vpop.permute.xlu0 %365
  %369 = vset.pattern.permute.xlu0 0
  %370 = vperm.xlu0 %369, %v340
  %v371 = vpop.permute.xlu0 %370
  %374 = vset.pattern.permute.xlu0 0
  %375 = vperm.xlu0 %374, %v341
  %v376 = vpop.permute.xlu0 %375
  %379 = vset.pattern.permute.xlu0 0
  %380 = vperm.xlu0 %379, %v342
  %v381 = vpop.permute.xlu0 %380
  %384 = vset.pattern.permute.xlu0 0
  %385 = vperm.xlu0 %384, %v343
  %v386 = vpop.permute.xlu0 %385
  %389 = vset.pattern.permute.xlu0 0
  %390 = vperm.xlu0 %389, %v344
  %v391 = vpop.permute.xlu0 %390
  %394 = vset.pattern.permute.xlu0 0
  %395 = vperm.xlu0 %394, %v345
  %v396 = vpop.permute.xlu0 %395
  %399 = vset.pattern.permute.xlu0 0
  %400 = vperm.xlu0 %399, %v346
  %v401 = vpop.permute.xlu0 %400
  %404 = vset.pattern.permute.xlu0 0
  %405 = vperm.xlu0 %404, %v347
  %v406 = vpop.permute.xlu0 %405
  %409 = vset.pattern.permute.xlu0 0
  %410 = vperm.xlu0 %409, %v348
  %v411 = vpop.permute.xlu0 %410
  %414 = vset.pattern.permute.xlu0 0
  %415 = vperm.xlu0 %414, %v349
  %v416 = vpop.permute.xlu0 %415
  %419 = vset.pattern.permute.xlu0 0
  %420 = vperm.xlu0 %419, %v350
  %v421 = vpop.permute.xlu0 %420
  %424 = vset.pattern.permute.xlu0 0
  %425 = vperm.xlu0 %424, %v351
  %v426 = vpop.permute.xlu0 %425
  %429 = vset.pattern.permute.xlu0 0
  %430 = vperm.xlu0 %429, %v352
  %v431 = vpop.permute.xlu0 %430
  %v433 = vadd.f32 %v321, %v356
  %v434 = vadd.f32 %v322, %v361
  %v435 = vadd.f32 %v323, %v366
  %v436 = vadd.f32 %v324, %v371
  %v437 = vadd.f32 %v325, %v376
  %v438 = vadd.f32 %v326, %v381
  %v439 = vadd.f32 %v327, %v386
  %v440 = vadd.f32 %v328, %v391
  %v441 = vadd.f32 %v329, %v396
  %v442 = vadd.f32 %v330, %v401
  %v443 = vadd.f32 %v331, %v406
  %v444 = vadd.f32 %v332, %v411
  %v445 = vadd.f32 %v333, %v416
  %v446 = vadd.f32 %v334, %v421
  %v447 = vadd.f32 %v335, %v426
  %v448 = vadd.f32 %v336, %v431
  %v449 = vpack.c.bf16 %v434, %v433
  %v450 = vpack.c.bf16 %v436, %v435
  %v451 = vpack.c.bf16 %v438, %v437
  %v452 = vpack.c.bf16 %v440, %v439
  %v453 = vpack.c.bf16 %v442, %v441
  %v454 = vpack.c.bf16 %v444, %v443
  %v455 = vpack.c.bf16 %v446, %v445
  %v456 = vpack.c.bf16 %v448, %v447
  %v457 = vtanh.bf16.pop %v449
  %v458 = vtanh.bf16.pop %v450
  %v459 = vtanh.bf16.pop %v451
  %v460 = vtanh.bf16.pop %v452
  %v461 = vtanh.bf16.pop %v453
  %v462 = vtanh.bf16.pop %v454
  %v463 = vtanh.bf16.pop %v455
  %v464 = vtanh.bf16.pop %v456
  %v465 = vld [vmem:[%s2] sm:$0xf]
  %v466 = vld [vmem:[%s2 + $0x4] sm:$0xf]
  %v467 = vld [vmem:[%s2 + $0x8] sm:$0xf]
  %v468 = vld [vmem:[%s2 + $0xc] sm:$0xf]
  %v469 = vld [vmem:[%s2 + $0x10] sm:$0xf]
  %v470 = vld [vmem:[%s2 + $0x14] sm:$0xf]
  %v471 = vld [vmem:[%s2 + $0x18] sm:$0xf]
  %v472 = vld [vmem:[%s2 + $0x1c] sm:$0xf]
  %v473 = vld [vmem:[%s2 + $0x20] sm:$0xf]
  %v474 = vld [vmem:[%s2 + $0x24] sm:$0xf]
  %v475 = vld [vmem:[%s2 + $0x28] sm:$0xf]
  %v476 = vld [vmem:[%s2 + $0x2c] sm:$0xf]
  %v477 = vld [vmem:[%s2 + $0x30] sm:$0xf]
  %v478 = vld [vmem:[%s2 + $0x34] sm:$0xf]
  %v479 = vld [vmem:[%s2 + $0x38] sm:$0xf]
  %v480 = vld [vmem:[%s2 + $0x3c] sm:$0xf]
  %s481 = scalar_lea.vmem %s3, 128
  %v482 = vld [vmem:[%s481] sm:$0xff]
  %v483 = vld [vmem:[%s481 + $0x8] sm:$0xff]
  %v484 = vld [vmem:[%s481 + $0x10] sm:$0xff]
  %v485 = vld [vmem:[%s481 + $0x18] sm:$0xff]
  %v486 = vld [vmem:[%s481 + $0x20] sm:$0xff]
  %v487 = vld [vmem:[%s481 + $0x28] sm:$0xff]
  %v488 = vld [vmem:[%s481 + $0x30] sm:$0xff]
  %v489 = vld [vmem:[%s481 + $0x38] sm:$0xff]
  %v490 = vld [vmem:[%s481 + $0x40] sm:$0xff]
  %v491 = vld [vmem:[%s481 + $0x48] sm:$0xff]
  %v492 = vld [vmem:[%s481 + $0x50] sm:$0xff]
  %v493 = vld [vmem:[%s481 + $0x58] sm:$0xff]
  %v494 = vld [vmem:[%s481 + $0x60] sm:$0xff]
  %v495 = vld [vmem:[%s481 + $0x68] sm:$0xff]
  %v496 = vld [vmem:[%s481 + $0x70] sm:$0xff]
  %v497 = vld [vmem:[%s481 + $0x78] sm:$0xff]
  %499 = vset.pattern.permute.xlu0 0
  %500 = vperm.xlu0 %499, %v482
  %v501 = vpop.permute.xlu0 %500
  %504 = vset.pattern.permute.xlu0 0
  %505 = vperm.xlu0 %504, %v483
  %v506 = vpop.permute.xlu0 %505
  %509 = vset.pattern.permute.xlu0 0
  %510 = vperm.xlu0 %509, %v484
  %v511 = vpop.permute.xlu0 %510
  %514 = vset.pattern.permute.xlu0 0
  %515 = vperm.xlu0 %514, %v485
  %v516 = vpop.permute.xlu0 %515
  %519 = vset.pattern.permute.xlu0 0
  %520 = vperm.xlu0 %519, %v486
  %v521 = vpop.permute.xlu0 %520
  %524 = vset.pattern.permute.xlu0 0
  %525 = vperm.xlu0 %524, %v487
  %v526 = vpop.permute.xlu0 %525
  %529 = vset.pattern.permute.xlu0 0
  %530 = vperm.xlu0 %529, %v488
  %v531 = vpop.permute.xlu0 %530
  %534 = vset.pattern.permute.xlu0 0
  %535 = vperm.xlu0 %534, %v489
  %v536 = vpop.permute.xlu0 %535
  %539 = vset.pattern.permute.xlu0 0
  %540 = vperm.xlu0 %539, %v490
  %v541 = vpop.permute.xlu0 %540
  %544 = vset.pattern.permute.xlu0 0
  %545 = vperm.xlu0 %544, %v491
  %v546 = vpop.permute.xlu0 %545
  %549 = vset.pattern.permute.xlu0 0
  %550 = vperm.xlu0 %549, %v492
  %v551 = vpop.permute.xlu0 %550
  %554 = vset.pattern.permute.xlu0 0
  %555 = vperm.xlu0 %554, %v493
  %v556 = vpop.permute.xlu0 %555
  %559 = vset.pattern.permute.xlu0 0
  %560 = vperm.xlu0 %559, %v494
  %v561 = vpop.permute.xlu0 %560
  %564 = vset.pattern.permute.xlu0 0
  %565 = vperm.xlu0 %564, %v495
  %v566 = vpop.permute.xlu0 %565
  %569 = vset.pattern.permute.xlu0 0
  %570 = vperm.xlu0 %569, %v496
  %v571 = vpop.permute.xlu0 %570
  %574 = vset.pattern.permute.xlu0 0
  %575 = vperm.xlu0 %574, %v497
  %v576 = vpop.permute.xlu0 %575
  %v594 = vunpack.c.l.b16 %v465
  %v595 = vunpack.c.l.b16 %v466
  %v596 = vunpack.c.l.b16 %v467
  %v597 = vunpack.c.l.b16 %v468
  %v598 = vunpack.c.l.b16 %v469
  %v599 = vunpack.c.l.b16 %v470
  %v600 = vunpack.c.l.b16 %v471
  %v601 = vunpack.c.l.b16 %v472
  %v602 = vunpack.c.l.b16 %v473
  %v603 = vunpack.c.l.b16 %v474
  %v604 = vunpack.c.l.b16 %v475
  %v605 = vunpack.c.l.b16 %v476
  %v606 = vunpack.c.l.b16 %v477
  %v607 = vunpack.c.l.b16 %v478
  %v608 = vunpack.c.l.b16 %v479
  %v609 = vunpack.c.l.b16 %v480
  %v610 = vpack.c.b16 %v595, %v594
  %v611 = vpack.c.b16 %v597, %v596
  %v612 = vpack.c.b16 %v599, %v598
  %v613 = vpack.c.b16 %v601, %v600
  %v614 = vpack.c.b16 %v603, %v602
  %v615 = vpack.c.b16 %v605, %v604
  %v616 = vpack.c.b16 %v607, %v606
  %v617 = vpack.c.b16 %v609, %v608
  %626 = vmatprep.subr.bf16.mxu0 0
  %627 = vmatpush1.bf16.msra.mxu0 %v457
  %628 = vmatprep.subr.bf16.mxu0 0
  %629 = vmatpush1.bf16.msra.mxu0 %v458
  %630 = vmatprep.subr.bf16.mxu0 0
  %631 = vmatpush1.bf16.msra.mxu0 %v459
  %632 = vmatprep.subr.bf16.mxu0 0
  %633 = vmatpush1.bf16.msra.mxu0 %v460
  %634 = vmatprep.subr.bf16.mxu0 0
  %635 = vmatpush1.bf16.msra.mxu0 %v461
  %636 = vmatprep.subr.bf16.mxu0 0
  %637 = vmatpush1.bf16.msra.mxu0 %v462
  %638 = vmatprep.subr.bf16.mxu0 0
  %639 = vmatpush1.bf16.msra.mxu0 %v463
  %640 = vmatprep.subr.bf16.mxu0 0
  %641 = vmatpush1.bf16.msra.mxu0 %v464
  %642 = vmatprep.subr.bf16.mxu0 0
  %643 = vmatpush1.bf16.msra.mxu0 0
  %644 = vmatprep.subr.bf16.mxu0 0
  %645 = vmatpush1.bf16.msra.mxu0 0
  %646 = vmatprep.subr.bf16.mxu0 0
  %647 = vmatpush1.bf16.msra.mxu0 0
  %648 = vmatprep.subr.bf16.mxu0 0
  %649 = vmatpush1.bf16.msra.mxu0 0
  %650 = vmatprep.subr.bf16.mxu0 0
  %651 = vmatpush1.bf16.msra.mxu0 0
  %652 = vmatprep.subr.bf16.mxu0 0
  %653 = vmatpush1.bf16.msra.mxu0 0
  %654 = vmatprep.subr.bf16.mxu0 0
  %655 = vmatpush1.bf16.msra.mxu0 0
  %656 = vmatprep.subr.bf16.mxu0 0
  %657 = vmatpush1.bf16.msra.mxu0 0
  %658 = vmatprep.mubr.bf16.mxu0 0
  %659 = vmatmul.mubr.bf16.gmra.mrb[0].mxu0 %v610
  %v660 = vpop.f32.mrb[0].mxu0
  %v661 = vadd.f32 %v501, %v660
  %v662 = vpop.f32.mrb[0].mxu0
  %v663 = vpop.f32.mrb[0].mxu0
  %v664 = vadd.f32 %v506, %v663
  %v665 = vpop.f32.mrb[0].mxu0
  %666 = vmatprep.mubr.bf16.mxu0 0
  %667 = vmatmul.mubr.bf16.gmra.mrb[0].mxu0 %v611
  %v668 = vpop.f32.mrb[0].mxu0
  %v669 = vadd.f32 %v511, %v668
  %v670 = vpop.f32.mrb[0].mxu0
  %v671 = vpop.f32.mrb[0].mxu0
  %v672 = vadd.f32 %v516, %v671
  %v673 = vpop.f32.mrb[0].mxu0
  %674 = vmatprep.mubr.bf16.mxu0 0
  %675 = vmatmul.mubr.bf16.gmra.mrb[0].mxu0 %v612
  %v676 = vpop.f32.mrb[0].mxu0
  %v677 = vadd.f32 %v521, %v676
  %v678 = vpop.f32.mrb[0].mxu0
  %v679 = vpop.f32.mrb[0].mxu0
  %v680 = vadd.f32 %v526, %v679
  %v681 = vpop.f32.mrb[0].mxu0
  %682 = vmatprep.mubr.bf16.mxu0 0
  %683 = vmatmul.mubr.bf16.gmra.mrb[0].mxu0 %v613
  %v684 = vpop.f32.mrb[0].mxu0
  %v685 = vadd.f32 %v531, %v684
  %v686 = vpop.f32.mrb[0].mxu0
  %v687 = vpop.f32.mrb[0].mxu0
  %v688 = vadd.f32 %v536, %v687
  %v689 = vpop.f32.mrb[0].mxu0
  %690 = vmatprep.mubr.bf16.mxu0 0
  %691 = vmatmul.mubr.bf16.gmra.mrb[0].mxu0 %v614
  %v692 = vpop.f32.mrb[0].mxu0
  %v693 = vadd.f32 %v541, %v692
  %v694 = vpop.f32.mrb[0].mxu0
  %v695 = vpop.f32.mrb[0].mxu0
  %v696 = vadd.f32 %v546, %v695
  %v697 = vpop.f32.mrb[0].mxu0
  %698 = vmatprep.mubr.bf16.mxu0 0
  %699 = vmatmul.mubr.bf16.gmra.mrb[0].mxu0 %v615
  %v700 = vpop.f32.mrb[0].mxu0
  %v701 = vadd.f32 %v551, %v700
  %v702 = vpop.f32.mrb[0].mxu0
  %v703 = vpop.f32.mrb[0].mxu0
  %v704 = vadd.f32 %v556, %v703
  %v705 = vpop.f32.mrb[0].mxu0
  %706 = vmatprep.mubr.bf16.mxu0 0
  %707 = vmatmul.mubr.bf16.gmra.mrb[0].mxu0 %v616
  %v708 = vpop.f32.mrb[0].mxu0
  %v709 = vadd.f32 %v561, %v708
  %v710 = vpop.f32.mrb[0].mxu0
  %v711 = vpop.f32.mrb[0].mxu0
  %v712 = vadd.f32 %v566, %v711
  %v713 = vpop.f32.mrb[0].mxu0
  %714 = vmatprep.mubr.bf16.mxu0 0
  %715 = vmatmul.mubr.bf16.gmra.mrb[0].mxu0 %v617
  %v716 = vpop.f32.mrb[0].mxu0
  %v717 = vadd.f32 %v571, %v716
  %v718 = vpop.f32.mrb[0].mxu0
  %v719 = vpop.f32.mrb[0].mxu0
  %v720 = vadd.f32 %v576, %v719
  %v721 = vpop.f32.mrb[0].mxu0
  %722 = vdwg.mxu0
  %v723 = vpack.c.bf16 %v664, %v661
  %v724 = vpack.c.bf16 %v672, %v669
  %v725 = vpack.c.bf16 %v680, %v677
  %v726 = vpack.c.bf16 %v688, %v685
  %v727 = vpack.c.bf16 %v696, %v693
  %v728 = vpack.c.bf16 %v704, %v701
  %v729 = vpack.c.bf16 %v712, %v709
  %v730 = vpack.c.bf16 %v720, %v717
  %v731 = vtanh.bf16.pop %v723
  %v732 = vtanh.bf16.pop %v724
  %v733 = vtanh.bf16.pop %v725
  %v734 = vtanh.bf16.pop %v726
  %v735 = vtanh.bf16.pop %v727
  %v736 = vtanh.bf16.pop %v728
  %v737 = vtanh.bf16.pop %v729
  %v738 = vtanh.bf16.pop %v730
  %s739 = scalar_lea.vmem %s2, 64
  %v740 = vld [vmem:[%s739] sm:$0xf]
  %v741 = vld [vmem:[%s739 + $0x4] sm:$0xf]
  %v742 = vld [vmem:[%s739 + $0x8] sm:$0xf]
  %v743 = vld [vmem:[%s739 + $0xc] sm:$0xf]
  %v744 = vld [vmem:[%s739 + $0x10] sm:$0xf]
  %v745 = vld [vmem:[%s739 + $0x14] sm:$0xf]
  %v746 = vld [vmem:[%s739 + $0x18] sm:$0xf]
  %v747 = vld [vmem:[%s739 + $0x1c] sm:$0xf]
  %v748 = vld [vmem:[%s739 + $0x20] sm:$0xf]
  %v749 = vld [vmem:[%s739 + $0x24] sm:$0xf]
  %v750 = vld [vmem:[%s739 + $0x28] sm:$0xf]
  %v751 = vld [vmem:[%s739 + $0x2c] sm:$0xf]
  %v752 = vld [vmem:[%s739 + $0x30] sm:$0xf]
  %v753 = vld [vmem:[%s739 + $0x34] sm:$0xf]
  %v754 = vld [vmem:[%s739 + $0x38] sm:$0xf]
  %v755 = vld [vmem:[%s739 + $0x3c] sm:$0xf]
  %s756 = scalar_lea.vmem %s3, 256
  %v757 = vld [vmem:[%s756] sm:$0xff]
  %v758 = vld [vmem:[%s756 + $0x8] sm:$0xff]
  %v759 = vld [vmem:[%s756 + $0x10] sm:$0xff]
  %v760 = vld [vmem:[%s756 + $0x18] sm:$0xff]
  %v761 = vld [vmem:[%s756 + $0x20] sm:$0xff]
  %v762 = vld [vmem:[%s756 + $0x28] sm:$0xff]
  %v763 = vld [vmem:[%s756 + $0x30] sm:$0xff]
  %v764 = vld [vmem:[%s756 + $0x38] sm:$0xff]
  %v765 = vld [vmem:[%s756 + $0x40] sm:$0xff]
  %v766 = vld [vmem:[%s756 + $0x48] sm:$0xff]
  %v767 = vld [vmem:[%s756 + $0x50] sm:$0xff]
  %v768 = vld [vmem:[%s756 + $0x58] sm:$0xff]
  %v769 = vld [vmem:[%s756 + $0x60] sm:$0xff]
  %v770 = vld [vmem:[%s756 + $0x68] sm:$0xff]
  %v771 = vld [vmem:[%s756 + $0x70] sm:$0xff]
  %v772 = vld [vmem:[%s756 + $0x78] sm:$0xff]
  %774 = vset.pattern.permute.xlu0 0
  %775 = vperm.xlu0 %774, %v757
  %v776 = vpop.permute.xlu0 %775
  %779 = vset.pattern.permute.xlu0 0
  %780 = vperm.xlu0 %779, %v758
  %v781 = vpop.permute.xlu0 %780
  %784 = vset.pattern.permute.xlu0 0
  %785 = vperm.xlu0 %784, %v759
  %v786 = vpop.permute.xlu0 %785
  %789 = vset.pattern.permute.xlu0 0
  %790 = vperm.xlu0 %789, %v760
  %v791 = vpop.permute.xlu0 %790
  %794 = vset.pattern.permute.xlu0 0
  %795 = vperm.xlu0 %794, %v761
  %v796 = vpop.permute.xlu0 %795
  %799 = vset.pattern.permute.xlu0 0
  %800 = vperm.xlu0 %799, %v762
  %v801 = vpop.permute.xlu0 %800
  %804 = vset.pattern.permute.xlu0 0
  %805 = vperm.xlu0 %804, %v763
  %v806 = vpop.permute.xlu0 %805
  %809 = vset.pattern.permute.xlu0 0
  %810 = vperm.xlu0 %809, %v764
  %v811 = vpop.permute.xlu0 %810
  %814 = vset.pattern.permute.xlu0 0
  %815 = vperm.xlu0 %814, %v765
  %v816 = vpop.permute.xlu0 %815
  %819 = vset.pattern.permute.xlu0 0
  %820 = vperm.xlu0 %819, %v766
  %v821 = vpop.permute.xlu0 %820
  %824 = vset.pattern.permute.xlu0 0
  %825 = vperm.xlu0 %824, %v767
  %v826 = vpop.permute.xlu0 %825
  %829 = vset.pattern.permute.xlu0 0
  %830 = vperm.xlu0 %829, %v768
  %v831 = vpop.permute.xlu0 %830
  %834 = vset.pattern.permute.xlu0 0
  %835 = vperm.xlu0 %834, %v769
  %v836 = vpop.permute.xlu0 %835
  %839 = vset.pattern.permute.xlu0 0
  %840 = vperm.xlu0 %839, %v770
  %v841 = vpop.permute.xlu0 %840
  %844 = vset.pattern.permute.xlu0 0
  %845 = vperm.xlu0 %844, %v771
  %v846 = vpop.permute.xlu0 %845
  %849 = vset.pattern.permute.xlu0 0
  %850 = vperm.xlu0 %849, %v772
  %v851 = vpop.permute.xlu0 %850
  %v869 = vunpack.c.l.b16 %v740
  %v870 = vunpack.c.l.b16 %v741
  %v871 = vunpack.c.l.b16 %v742
  %v872 = vunpack.c.l.b16 %v743
  %v873 = vunpack.c.l.b16 %v744
  %v874 = vunpack.c.l.b16 %v745
  %v875 = vunpack.c.l.b16 %v746
  %v876 = vunpack.c.l.b16 %v747
  %v877 = vunpack.c.l.b16 %v748
  %v878 = vunpack.c.l.b16 %v749
  %v879 = vunpack.c.l.b16 %v750
  %v880 = vunpack.c.l.b16 %v751
  %v881 = vunpack.c.l.b16 %v752
  %v882 = vunpack.c.l.b16 %v753
  %v883 = vunpack.c.l.b16 %v754
  %v884 = vunpack.c.l.b16 %v755
  %v885 = vpack.c.b16 %v870, %v869
  %v886 = vpack.c.b16 %v872, %v871
  %v887 = vpack.c.b16 %v874, %v873
  %v888 = vpack.c.b16 %v876, %v875
  %v889 = vpack.c.b16 %v878, %v877
  %v890 = vpack.c.b16 %v880, %v879
  %v891 = vpack.c.b16 %v882, %v881
  %v892 = vpack.c.b16 %v884, %v883
  %901 = vmatprep.subr.bf16.mxu0 0
  %902 = vmatpush1.bf16.msra.mxu0 %v731
  %903 = vmatprep.subr.bf16.mxu0 0
  %904 = vmatpush1.bf16.msra.mxu0 %v732
  %905 = vmatprep.subr.bf16.mxu0 0
  %906 = vmatpush1.bf16.msra.mxu0 %v733
  %907 = vmatprep.subr.bf16.mxu0 0
  %908 = vmatpush1.bf16.msra.mxu0 %v734
  %909 = vmatprep.subr.bf16.mxu0 0
  %910 = vmatpush1.bf16.msra.mxu0 %v735
  %911 = vmatprep.subr.bf16.mxu0 0
  %912 = vmatpush1.bf16.msra.mxu0 %v736
  %913 = vmatprep.subr.bf16.mxu0 0
  %914 = vmatpush1.bf16.msra.mxu0 %v737
  %915 = vmatprep.subr.bf16.mxu0 0
  %916 = vmatpush1.bf16.msra.mxu0 %v738
  %917 = vmatprep.subr.bf16.mxu0 0
  %918 = vmatpush1.bf16.msra.mxu0 0
  %919 = vmatprep.subr.bf16.mxu0 0
  %920 = vmatpush1.bf16.msra.mxu0 0
  %921 = vmatprep.subr.bf16.mxu0 0
  %922 = vmatpush1.bf16.msra.mxu0 0
  %923 = vmatprep.subr.bf16.mxu0 0
  %924 = vmatpush1.bf16.msra.mxu0 0
  %925 = vmatprep.subr.bf16.mxu0 0
  %926 = vmatpush1.bf16.msra.mxu0 0
  %927 = vmatprep.subr.bf16.mxu0 0
  %928 = vmatpush1.bf16.msra.mxu0 0
  %929 = vmatprep.subr.bf16.mxu0 0
  %930 = vmatpush1.bf16.msra.mxu0 0
  %931 = vmatprep.subr.bf16.mxu0 0
  %932 = vmatpush1.bf16.msra.mxu0 0
  %933 = vmatprep.mubr.bf16.mxu0 0
  %934 = vmatmul.mubr.bf16.gmra.mrb[0].mxu0 %v885
  %v935 = vpop.f32.mrb[0].mxu0
  %v936 = vadd.f32 %v776, %v935
  %v937 = vpop.f32.mrb[0].mxu0
  %v938 = vpop.f32.mrb[0].mxu0
  %v939 = vadd.f32 %v781, %v938
  %v940 = vpop.f32.mrb[0].mxu0
  %941 = vmatprep.mubr.bf16.mxu0 0
  %942 = vmatmul.mubr.bf16.gmra.mrb[0].mxu0 %v886
  %v943 = vpop.f32.mrb[0].mxu0
  %v944 = vadd.f32 %v786, %v943
  %v945 = vpop.f32.mrb[0].mxu0
  %v946 = vpop.f32.mrb[0].mxu0
  %v947 = vadd.f32 %v791, %v946
  %v948 = vpop.f32.mrb[0].mxu0
  %949 = vmatprep.mubr.bf16.mxu0 0
  %950 = vmatmul.mubr.bf16.gmra.mrb[0].mxu0 %v887
  %v951 = vpop.f32.mrb[0].mxu0
  %v952 = vadd.f32 %v796, %v951
  %v953 = vpop.f32.mrb[0].mxu0
  %v954 = vpop.f32.mrb[0].mxu0
  %v955 = vadd.f32 %v801, %v954
  %v956 = vpop.f32.mrb[0].mxu0
  %957 = vmatprep.mubr.bf16.mxu0 0
  %958 = vmatmul.mubr.bf16.gmra.mrb[0].mxu0 %v888
  %v959 = vpop.f32.mrb[0].mxu0
  %v960 = vadd.f32 %v806, %v959
  %v961 = vpop.f32.mrb[0].mxu0
  %v962 = vpop.f32.mrb[0].mxu0
  %v963 = vadd.f32 %v811, %v962
  %v964 = vpop.f32.mrb[0].mxu0
  %965 = vmatprep.mubr.bf16.mxu0 0
  %966 = vmatmul.mubr.bf16.gmra.mrb[0].mxu0 %v889
  %v967 = vpop.f32.mrb[0].mxu0
  %v968 = vadd.f32 %v816, %v967
  %v969 = vpop.f32.mrb[0].mxu0
  %v970 = vpop.f32.mrb[0].mxu0
  %v971 = vadd.f32 %v821, %v970
  %v972 = vpop.f32.mrb[0].mxu0
  %973 = vmatprep.mubr.bf16.mxu0 0
  %974 = vmatmul.mubr.bf16.gmra.mrb[0].mxu0 %v890
  %v975 = vpop.f32.mrb[0].mxu0
  %v976 = vadd.f32 %v826, %v975
  %v977 = vpop.f32.mrb[0].mxu0
  %v978 = vpop.f32.mrb[0].mxu0
  %v979 = vadd.f32 %v831, %v978
  %v980 = vpop.f32.mrb[0].mxu0
  %981 = vmatprep.mubr.bf16.mxu0 0
  %982 = vmatmul.mubr.bf16.gmra.mrb[0].mxu0 %v891
  %v983 = vpop.f32.mrb[0].mxu0
  %v984 = vadd.f32 %v836, %v983
  %v985 = vpop.f32.mrb[0].mxu0
  %v986 = vpop.f32.mrb[0].mxu0
  %v987 = vadd.f32 %v841, %v986
  %v988 = vpop.f32.mrb[0].mxu0
  %989 = vmatprep.mubr.bf16.mxu0 0
  %990 = vmatmul.mubr.bf16.gmra.mrb[0].mxu0 %v892
  %v991 = vpop.f32.mrb[0].mxu0
  %v992 = vadd.f32 %v846, %v991
  %v993 = vpop.f32.mrb[0].mxu0
  %v994 = vpop.f32.mrb[0].mxu0
  %v995 = vadd.f32 %v851, %v994
  %v996 = vpop.f32.mrb[0].mxu0
  %997 = vdwg.mxu0
  %v998 = vpack.c.bf16 %v939, %v936
  %v999 = vpack.c.bf16 %v947, %v944
  %v1000 = vpack.c.bf16 %v955, %v952
  %v1001 = vpack.c.bf16 %v963, %v960
  %v1002 = vpack.c.bf16 %v971, %v968
  %v1003 = vpack.c.bf16 %v979, %v976
  %v1004 = vpack.c.bf16 %v987, %v984
  %v1005 = vpack.c.bf16 %v995, %v992
  %v1006 = vtanh.bf16.pop %v998
  %v1007 = vtanh.bf16.pop %v999
  %v1008 = vtanh.bf16.pop %v1000
  %v1009 = vtanh.bf16.pop %v1001
  %v1010 = vtanh.bf16.pop %v1002
  %v1011 = vtanh.bf16.pop %v1003
  %v1012 = vtanh.bf16.pop %v1004
  %v1013 = vtanh.bf16.pop %v1005
  %s1014 = scalar_lea.vmem %s2, 128
  %v1015 = vld [vmem:[%s1014] sm:$0xf]
  %v1016 = vld [vmem:[%s1014 + $0x4] sm:$0xf]
  %v1017 = vld [vmem:[%s1014 + $0x8] sm:$0xf]
  %v1018 = vld [vmem:[%s1014 + $0xc] sm:$0xf]
  %v1019 = vld [vmem:[%s1014 + $0x10] sm:$0xf]
  %v1020 = vld [vmem:[%s1014 + $0x14] sm:$0xf]
  %v1021 = vld [vmem:[%s1014 + $0x18] sm:$0xf]
  %v1022 = vld [vmem:[%s1014 + $0x1c] sm:$0xf]
  %v1023 = vld [vmem:[%s1014 + $0x20] sm:$0xf]
  %v1024 = vld [vmem:[%s1014 + $0x24] sm:$0xf]
  %v1025 = vld [vmem:[%s1014 + $0x28] sm:$0xf]
  %v1026 = vld [vmem:[%s1014 + $0x2c] sm:$0xf]
  %v1027 = vld [vmem:[%s1014 + $0x30] sm:$0xf]
  %v1028 = vld [vmem:[%s1014 + $0x34] sm:$0xf]
  %v1029 = vld [vmem:[%s1014 + $0x38] sm:$0xf]
  %v1030 = vld [vmem:[%s1014 + $0x3c] sm:$0xf]
  %s1031 = scalar_lea.vmem %s3, 384
  %v1032 = vld [vmem:[%s1031] sm:$0xff]
  %v1033 = vld [vmem:[%s1031 + $0x8] sm:$0xff]
  %v1034 = vld [vmem:[%s1031 + $0x10] sm:$0xff]
  %v1035 = vld [vmem:[%s1031 + $0x18] sm:$0xff]
  %v1036 = vld [vmem:[%s1031 + $0x20] sm:$0xff]
  %v1037 = vld [vmem:[%s1031 + $0x28] sm:$0xff]
  %v1038 = vld [vmem:[%s1031 + $0x30] sm:$0xff]
  %v1039 = vld [vmem:[%s1031 + $0x38] sm:$0xff]
  %v1040 = vld [vmem:[%s1031 + $0x40] sm:$0xff]
  %v1041 = vld [vmem:[%s1031 + $0x48] sm:$0xff]
  %v1042 = vld [vmem:[%s1031 + $0x50] sm:$0xff]
  %v1043 = vld [vmem:[%s1031 + $0x58] sm:$0xff]
  %v1044 = vld [vmem:[%s1031 + $0x60] sm:$0xff]
  %v1045 = vld [vmem:[%s1031 + $0x68] sm:$0xff]
  %v1046 = vld [vmem:[%s1031 + $0x70] sm:$0xff]
  %v1047 = vld [vmem:[%s1031 + $0x78] sm:$0xff]
  %1049 = vset.pattern.permute.xlu0 0
  %1050 = vperm.xlu0 %1049, %v1032
  %v1051 = vpop.permute.xlu0 %1050
  %1054 = vset.pattern.permute.xlu0 0
  %1055 = vperm.xlu0 %1054, %v1033
  %v1056 = vpop.permute.xlu0 %1055
  %1059 = vset.pattern.permute.xlu0 0
  %1060 = vperm.xlu0 %1059, %v1034
  %v1061 = vpop.permute.xlu0 %1060
  %1064 = vset.pattern.permute.xlu0 0
  %1065 = vperm.xlu0 %1064, %v1035
  %v1066 = vpop.permute.xlu0 %1065
  %1069 = vset.pattern.permute.xlu0 0
  %1070 = vperm.xlu0 %1069, %v1036
  %v1071 = vpop.permute.xlu0 %1070
  %1074 = vset.pattern.permute.xlu0 0
  %1075 = vperm.xlu0 %1074, %v1037
  %v1076 = vpop.permute.xlu0 %1075
  %1079 = vset.pattern.permute.xlu0 0
  %1080 = vperm.xlu0 %1079, %v1038
  %v1081 = vpop.permute.xlu0 %1080
  %1084 = vset.pattern.permute.xlu0 0
  %1085 = vperm.xlu0 %1084, %v1039
  %v1086 = vpop.permute.xlu0 %1085
  %1089 = vset.pattern.permute.xlu0 0
  %1090 = vperm.xlu0 %1089, %v1040
  %v1091 = vpop.permute.xlu0 %1090
  %1094 = vset.pattern.permute.xlu0 0
  %1095 = vperm.xlu0 %1094, %v1041
  %v1096 = vpop.permute.xlu0 %1095
  %1099 = vset.pattern.permute.xlu0 0
  %1100 = vperm.xlu0 %1099, %v1042
  %v1101 = vpop.permute.xlu0 %1100
  %1104 = vset.pattern.permute.xlu0 0
  %1105 = vperm.xlu0 %1104, %v1043
  %v1106 = vpop.permute.xlu0 %1105
  %1109 = vset.pattern.permute.xlu0 0
  %1110 = vperm.xlu0 %1109, %v1044
  %v1111 = vpop.permute.xlu0 %1110
  %1114 = vset.pattern.permute.xlu0 0
  %1115 = vperm.xlu0 %1114, %v1045
  %v1116 = vpop.permute.xlu0 %1115
  %1119 = vset.pattern.permute.xlu0 0
  %1120 = vperm.xlu0 %1119, %v1046
  %v1121 = vpop.permute.xlu0 %1120
  %1124 = vset.pattern.permute.xlu0 0
  %1125 = vperm.xlu0 %1124, %v1047
  %v1126 = vpop.permute.xlu0 %1125
  %v1144 = vunpack.c.l.b16 %v1015
  %v1145 = vunpack.c.l.b16 %v1016
  %v1146 = vunpack.c.l.b16 %v1017
  %v1147 = vunpack.c.l.b16 %v1018
  %v1148 = vunpack.c.l.b16 %v1019
  %v1149 = vunpack.c.l.b16 %v1020
  %v1150 = vunpack.c.l.b16 %v1021
  %v1151 = vunpack.c.l.b16 %v1022
  %v1152 = vunpack.c.l.b16 %v1023
  %v1153 = vunpack.c.l.b16 %v1024
  %v1154 = vunpack.c.l.b16 %v1025
  %v1155 = vunpack.c.l.b16 %v1026
  %v1156 = vunpack.c.l.b16 %v1027
  %v1157 = vunpack.c.l.b16 %v1028
  %v1158 = vunpack.c.l.b16 %v1029
  %v1159 = vunpack.c.l.b16 %v1030
  %v1160 = vpack.c.b16 %v1145, %v1144
  %v1161 = vpack.c.b16 %v1147, %v1146
  %v1162 = vpack.c.b16 %v1149, %v1148
  %v1163 = vpack.c.b16 %v1151, %v1150
  %v1164 = vpack.c.b16 %v1153, %v1152
  %v1165 = vpack.c.b16 %v1155, %v1154
  %v1166 = vpack.c.b16 %v1157, %v1156
  %v1167 = vpack.c.b16 %v1159, %v1158
  %1176 = vmatprep.subr.bf16.mxu0 0
  %1177 = vmatpush1.bf16.msra.mxu0 %v1006
  %1178 = vmatprep.subr.bf16.mxu0 0
  %1179 = vmatpush1.bf16.msra.mxu0 %v1007
  %1180 = vmatprep.subr.bf16.mxu0 0
  %1181 = vmatpush1.bf16.msra.mxu0 %v1008
  %1182 = vmatprep.subr.bf16.mxu0 0
  %1183 = vmatpush1.bf16.msra.mxu0 %v1009
  %1184 = vmatprep.subr.bf16.mxu0 0
  %1185 = vmatpush1.bf16.msra.mxu0 %v1010
  %1186 = vmatprep.subr.bf16.mxu0 0
  %1187 = vmatpush1.bf16.msra.mxu0 %v1011
  %1188 = vmatprep.subr.bf16.mxu0 0
  %1189 = vmatpush1.bf16.msra.mxu0 %v1012
  %1190 = vmatprep.subr.bf16.mxu0 0
  %1191 = vmatpush1.bf16.msra.mxu0 %v1013
  %1192 = vmatprep.subr.bf16.mxu0 0
  %1193 = vmatpush1.bf16.msra.mxu0 0
  %1194 = vmatprep.subr.bf16.mxu0 0
  %1195 = vmatpush1.bf16.msra.mxu0 0
  %1196 = vmatprep.subr.bf16.mxu0 0
  %1197 = vmatpush1.bf16.msra.mxu0 0
  %1198 = vmatprep.subr.bf16.mxu0 0
  %1199 = vmatpush1.bf16.msra.mxu0 0
  %1200 = vmatprep.subr.bf16.mxu0 0
  %1201 = vmatpush1.bf16.msra.mxu0 0
  %1202 = vmatprep.subr.bf16.mxu0 0
  %1203 = vmatpush1.bf16.msra.mxu0 0
  %1204 = vmatprep.subr.bf16.mxu0 0
  %1205 = vmatpush1.bf16.msra.mxu0 0
  %1206 = vmatprep.subr.bf16.mxu0 0
  %1207 = vmatpush1.bf16.msra.mxu0 0
  %1208 = vmatprep.mubr.bf16.mxu0 0
  %1209 = vmatmul.mubr.bf16.gmra.mrb[0].mxu0 %v1160
  %v1210 = vpop.f32.mrb[0].mxu0
  %v1211 = vadd.f32 %v1051, %v1210
  %v1212 = vpop.f32.mrb[0].mxu0
  %v1213 = vpop.f32.mrb[0].mxu0
  %v1214 = vadd.f32 %v1056, %v1213
  %v1215 = vpop.f32.mrb[0].mxu0
  %1216 = vmatprep.mubr.bf16.mxu0 0
  %1217 = vmatmul.mubr.bf16.gmra.mrb[0].mxu0 %v1161
  %v1218 = vpop.f32.mrb[0].mxu0
  %v1219 = vadd.f32 %v1061, %v1218
  %v1220 = vpop.f32.mrb[0].mxu0
  %v1221 = vpop.f32.mrb[0].mxu0
  %v1222 = vadd.f32 %v1066, %v1221
  %v1223 = vpop.f32.mrb[0].mxu0
  %1224 = vmatprep.mubr.bf16.mxu0 0
  %1225 = vmatmul.mubr.bf16.gmra.mrb[0].mxu0 %v1162
  %v1226 = vpop.f32.mrb[0].mxu0
  %v1227 = vadd.f32 %v1071, %v1226
  %v1228 = vpop.f32.mrb[0].mxu0
  %v1229 = vpop.f32.mrb[0].mxu0
  %v1230 = vadd.f32 %v1076, %v1229
  %v1231 = vpop.f32.mrb[0].mxu0
  %1232 = vmatprep.mubr.bf16.mxu0 0
  %1233 = vmatmul.mubr.bf16.gmra.mrb[0].mxu0 %v1163
  %v1234 = vpop.f32.mrb[0].mxu0
  %v1235 = vadd.f32 %v1081, %v1234
  %v1236 = vpop.f32.mrb[0].mxu0
  %v1237 = vpop.f32.mrb[0].mxu0
  %v1238 = vadd.f32 %v1086, %v1237
  %v1239 = vpop.f32.mrb[0].mxu0
  %1240 = vmatprep.mubr.bf16.mxu0 0
  %1241 = vmatmul.mubr.bf16.gmra.mrb[0].mxu0 %v1164
  %v1242 = vpop.f32.mrb[0].mxu0
  %v1243 = vadd.f32 %v1091, %v1242
  %v1244 = vpop.f32.mrb[0].mxu0
  %v1245 = vpop.f32.mrb[0].mxu0
  %v1246 = vadd.f32 %v1096, %v1245
  %v1247 = vpop.f32.mrb[0].mxu0
  %1248 = vmatprep.mubr.bf16.mxu0 0
  %1249 = vmatmul.mubr.bf16.gmra.mrb[0].mxu0 %v1165
  %v1250 = vpop.f32.mrb[0].mxu0
  %v1251 = vadd.f32 %v1101, %v1250
  %v1252 = vpop.f32.mrb[0].mxu0
  %v1253 = vpop.f32.mrb[0].mxu0
  %v1254 = vadd.f32 %v1106, %v1253
  %v1255 = vpop.f32.mrb[0].mxu0
  %1256 = vmatprep.mubr.bf16.mxu0 0
  %1257 = vmatmul.mubr.bf16.gmra.mrb[0].mxu0 %v1166
  %v1258 = vpop.f32.mrb[0].mxu0
  %v1259 = vadd.f32 %v1111, %v1258
  %v1260 = vpop.f32.mrb[0].mxu0
  %v1261 = vpop.f32.mrb[0].mxu0
  %v1262 = vadd.f32 %v1116, %v1261
  %v1263 = vpop.f32.mrb[0].mxu0
  %1264 = vmatprep.mubr.bf16.mxu0 0
  %1265 = vmatmul.mubr.bf16.gmra.mrb[0].mxu0 %v1167
  %v1266 = vpop.f32.mrb[0].mxu0
  %v1267 = vadd.f32 %v1121, %v1266
  %v1268 = vpop.f32.mrb[0].mxu0
  %v1269 = vpop.f32.mrb[0].mxu0
  %v1270 = vadd.f32 %v1126, %v1269
  %v1271 = vpop.f32.mrb[0].mxu0
  %1272 = vdwg.mxu0
  %v1273 = vpack.c.bf16 %v1214, %v1211
  %v1274 = vpack.c.bf16 %v1222, %v1219
  %v1275 = vpack.c.bf16 %v1230, %v1227
  %v1276 = vpack.c.bf16 %v1238, %v1235
  %v1277 = vpack.c.bf16 %v1246, %v1243
  %v1278 = vpack.c.bf16 %v1254, %v1251
  %v1279 = vpack.c.bf16 %v1262, %v1259
  %v1280 = vpack.c.bf16 %v1270, %v1267
  %v1281 = vtanh.bf16.pop %v1273
  %v1282 = vtanh.bf16.pop %v1274
  %v1283 = vtanh.bf16.pop %v1275
  %v1284 = vtanh.bf16.pop %v1276
  %v1285 = vtanh.bf16.pop %v1277
  %v1286 = vtanh.bf16.pop %v1278
  %v1287 = vtanh.bf16.pop %v1279
  %v1288 = vtanh.bf16.pop %v1280
  %s1289 = scalar_lea.vmem %s2, 192
  %v1290 = vld [vmem:[%s1289] sm:$0xf]
  %v1291 = vld [vmem:[%s1289 + $0x4] sm:$0xf]
  %v1292 = vld [vmem:[%s1289 + $0x8] sm:$0xf]
  %v1293 = vld [vmem:[%s1289 + $0xc] sm:$0xf]
  %v1294 = vld [vmem:[%s1289 + $0x10] sm:$0xf]
  %v1295 = vld [vmem:[%s1289 + $0x14] sm:$0xf]
  %v1296 = vld [vmem:[%s1289 + $0x18] sm:$0xf]
  %v1297 = vld [vmem:[%s1289 + $0x1c] sm:$0xf]
  %v1298 = vld [vmem:[%s1289 + $0x20] sm:$0xf]
  %v1299 = vld [vmem:[%s1289 + $0x24] sm:$0xf]
  %v1300 = vld [vmem:[%s1289 + $0x28] sm:$0xf]
  %v1301 = vld [vmem:[%s1289 + $0x2c] sm:$0xf]
  %v1302 = vld [vmem:[%s1289 + $0x30] sm:$0xf]
  %v1303 = vld [vmem:[%s1289 + $0x34] sm:$0xf]
  %v1304 = vld [vmem:[%s1289 + $0x38] sm:$0xf]
  %v1305 = vld [vmem:[%s1289 + $0x3c] sm:$0xf]
  %s1306 = scalar_lea.vmem %s3, 512
  %v1307 = vld [vmem:[%s1306] sm:$0xff]
  %v1308 = vld [vmem:[%s1306 + $0x8] sm:$0xff]
  %v1309 = vld [vmem:[%s1306 + $0x10] sm:$0xff]
  %v1310 = vld [vmem:[%s1306 + $0x18] sm:$0xff]
  %v1311 = vld [vmem:[%s1306 + $0x20] sm:$0xff]
  %v1312 = vld [vmem:[%s1306 + $0x28] sm:$0xff]
  %v1313 = vld [vmem:[%s1306 + $0x30] sm:$0xff]
  %v1314 = vld [vmem:[%s1306 + $0x38] sm:$0xff]
  %v1315 = vld [vmem:[%s1306 + $0x40] sm:$0xff]
  %v1316 = vld [vmem:[%s1306 + $0x48] sm:$0xff]
  %v1317 = vld [vmem:[%s1306 + $0x50] sm:$0xff]
  %v1318 = vld [vmem:[%s1306 + $0x58] sm:$0xff]
  %v1319 = vld [vmem:[%s1306 + $0x60] sm:$0xff]
  %v1320 = vld [vmem:[%s1306 + $0x68] sm:$0xff]
  %v1321 = vld [vmem:[%s1306 + $0x70] sm:$0xff]
  %v1322 = vld [vmem:[%s1306 + $0x78] sm:$0xff]
  %1324 = vset.pattern.permute.xlu0 0
  %1325 = vperm.xlu0 %1324, %v1307
  %v1326 = vpop.permute.xlu0 %1325
  %1329 = vset.pattern.permute.xlu0 0
  %1330 = vperm.xlu0 %1329, %v1308
  %v1331 = vpop.permute.xlu0 %1330
  %1334 = vset.pattern.permute.xlu0 0
  %1335 = vperm.xlu0 %1334, %v1309
  %v1336 = vpop.permute.xlu0 %1335
  %1339 = vset.pattern.permute.xlu0 0
  %1340 = vperm.xlu0 %1339, %v1310
  %v1341 = vpop.permute.xlu0 %1340
  %1344 = vset.pattern.permute.xlu0 0
  %1345 = vperm.xlu0 %1344, %v1311
  %v1346 = vpop.permute.xlu0 %1345
  %1349 = vset.pattern.permute.xlu0 0
  %1350 = vperm.xlu0 %1349, %v1312
  %v1351 = vpop.permute.xlu0 %1350
  %1354 = vset.pattern.permute.xlu0 0
  %1355 = vperm.xlu0 %1354, %v1313
  %v1356 = vpop.permute.xlu0 %1355
  %1359 = vset.pattern.permute.xlu0 0
  %1360 = vperm.xlu0 %1359, %v1314
  %v1361 = vpop.permute.xlu0 %1360
  %1364 = vset.pattern.permute.xlu0 0
  %1365 = vperm.xlu0 %1364, %v1315
  %v1366 = vpop.permute.xlu0 %1365
  %1369 = vset.pattern.permute.xlu0 0
  %1370 = vperm.xlu0 %1369, %v1316
  %v1371 = vpop.permute.xlu0 %1370
  %1374 = vset.pattern.permute.xlu0 0
  %1375 = vperm.xlu0 %1374, %v1317
  %v1376 = vpop.permute.xlu0 %1375
  %1379 = vset.pattern.permute.xlu0 0
  %1380 = vperm.xlu0 %1379, %v1318
  %v1381 = vpop.permute.xlu0 %1380
  %1384 = vset.pattern.permute.xlu0 0
  %1385 = vperm.xlu0 %1384, %v1319
  %v1386 = vpop.permute.xlu0 %1385
  %1389 = vset.pattern.permute.xlu0 0
  %1390 = vperm.xlu0 %1389, %v1320
  %v1391 = vpop.permute.xlu0 %1390
  %1394 = vset.pattern.permute.xlu0 0
  %1395 = vperm.xlu0 %1394, %v1321
  %v1396 = vpop.permute.xlu0 %1395
  %1399 = vset.pattern.permute.xlu0 0
  %1400 = vperm.xlu0 %1399, %v1322
  %v1401 = vpop.permute.xlu0 %1400
  %v1419 = vunpack.c.l.b16 %v1290
  %v1420 = vunpack.c.l.b16 %v1291
  %v1421 = vunpack.c.l.b16 %v1292
  %v1422 = vunpack.c.l.b16 %v1293
  %v1423 = vunpack.c.l.b16 %v1294
  %v1424 = vunpack.c.l.b16 %v1295
  %v1425 = vunpack.c.l.b16 %v1296
  %v1426 = vunpack.c.l.b16 %v1297
  %v1427 = vunpack.c.l.b16 %v1298
  %v1428 = vunpack.c.l.b16 %v1299
  %v1429 = vunpack.c.l.b16 %v1300
  %v1430 = vunpack.c.l.b16 %v1301
  %v1431 = vunpack.c.l.b16 %v1302
  %v1432 = vunpack.c.l.b16 %v1303
  %v1433 = vunpack.c.l.b16 %v1304
  %v1434 = vunpack.c.l.b16 %v1305
  %v1435 = vpack.c.b16 %v1420, %v1419
  %v1436 = vpack.c.b16 %v1422, %v1421
  %v1437 = vpack.c.b16 %v1424, %v1423
  %v1438 = vpack.c.b16 %v1426, %v1425
  %v1439 = vpack.c.b16 %v1428, %v1427
  %v1440 = vpack.c.b16 %v1430, %v1429
  %v1441 = vpack.c.b16 %v1432, %v1431
  %v1442 = vpack.c.b16 %v1434, %v1433
  %1451 = vmatprep.subr.bf16.mxu0 0
  %1452 = vmatpush1.bf16.msra.mxu0 %v1281
  %1453 = vmatprep.subr.bf16.mxu0 0
  %1454 = vmatpush1.bf16.msra.mxu0 %v1282
  %1455 = vmatprep.subr.bf16.mxu0 0
  %1456 = vmatpush1.bf16.msra.mxu0 %v1283
  %1457 = vmatprep.subr.bf16.mxu0 0
  %1458 = vmatpush1.bf16.msra.mxu0 %v1284
  %1459 = vmatprep.subr.bf16.mxu0 0
  %1460 = vmatpush1.bf16.msra.mxu0 %v1285
  %1461 = vmatprep.subr.bf16.mxu0 0
  %1462 = vmatpush1.bf16.msra.mxu0 %v1286
  %1463 = vmatprep.subr.bf16.mxu0 0
  %1464 = vmatpush1.bf16.msra.mxu0 %v1287
  %1465 = vmatprep.subr.bf16.mxu0 0
  %1466 = vmatpush1.bf16.msra.mxu0 %v1288
  %1467 = vmatprep.subr.bf16.mxu0 0
  %1468 = vmatpush1.bf16.msra.mxu0 0
  %1469 = vmatprep.subr.bf16.mxu0 0
  %1470 = vmatpush1.bf16.msra.mxu0 0
  %1471 = vmatprep.subr.bf16.mxu0 0
  %1472 = vmatpush1.bf16.msra.mxu0 0
  %1473 = vmatprep.subr.bf16.mxu0 0
  %1474 = vmatpush1.bf16.msra.mxu0 0
  %1475 = vmatprep.subr.bf16.mxu0 0
  %1476 = vmatpush1.bf16.msra.mxu0 0
  %1477 = vmatprep.subr.bf16.mxu0 0
  %1478 = vmatpush1.bf16.msra.mxu0 0
  %1479 = vmatprep.subr.bf16.mxu0 0
  %1480 = vmatpush1.bf16.msra.mxu0 0
  %1481 = vmatprep.subr.bf16.mxu0 0
  %1482 = vmatpush1.bf16.msra.mxu0 0
  %1483 = vmatprep.mubr.bf16.mxu0 0
  %1484 = vmatmul.mubr.bf16.gmra.mrb[0].mxu0 %v1435
  %v1485 = vpop.f32.mrb[0].mxu0
  %v1486 = vadd.f32 %v1326, %v1485
  %v1487 = vpop.f32.mrb[0].mxu0
  %v1488 = vpop.f32.mrb[0].mxu0
  %v1489 = vadd.f32 %v1331, %v1488
  %v1490 = vpop.f32.mrb[0].mxu0
  %1491 = vmatprep.mubr.bf16.mxu0 0
  %1492 = vmatmul.mubr.bf16.gmra.mrb[0].mxu0 %v1436
  %v1493 = vpop.f32.mrb[0].mxu0
  %v1494 = vadd.f32 %v1336, %v1493
  %v1495 = vpop.f32.mrb[0].mxu0
  %v1496 = vpop.f32.mrb[0].mxu0
  %v1497 = vadd.f32 %v1341, %v1496
  %v1498 = vpop.f32.mrb[0].mxu0
  %1499 = vmatprep.mubr.bf16.mxu0 0
  %1500 = vmatmul.mubr.bf16.gmra.mrb[0].mxu0 %v1437
  %v1501 = vpop.f32.mrb[0].mxu0
  %v1502 = vadd.f32 %v1346, %v1501
  %v1503 = vpop.f32.mrb[0].mxu0
  %v1504 = vpop.f32.mrb[0].mxu0
  %v1505 = vadd.f32 %v1351, %v1504
  %v1506 = vpop.f32.mrb[0].mxu0
  %1507 = vmatprep.mubr.bf16.mxu0 0
  %1508 = vmatmul.mubr.bf16.gmra.mrb[0].mxu0 %v1438
  %v1509 = vpop.f32.mrb[0].mxu0
  %v1510 = vadd.f32 %v1356, %v1509
  %v1511 = vpop.f32.mrb[0].mxu0
  %v1512 = vpop.f32.mrb[0].mxu0
  %v1513 = vadd.f32 %v1361, %v1512
  %v1514 = vpop.f32.mrb[0].mxu0
  %1515 = vmatprep.mubr.bf16.mxu0 0
  %1516 = vmatmul.mubr.bf16.gmra.mrb[0].mxu0 %v1439
  %v1517 = vpop.f32.mrb[0].mxu0
  %v1518 = vadd.f32 %v1366, %v1517
  %v1519 = vpop.f32.mrb[0].mxu0
  %v1520 = vpop.f32.mrb[0].mxu0
  %v1521 = vadd.f32 %v1371, %v1520
  %v1522 = vpop.f32.mrb[0].mxu0
  %1523 = vmatprep.mubr.bf16.mxu0 0
  %1524 = vmatmul.mubr.bf16.gmra.mrb[0].mxu0 %v1440
  %v1525 = vpop.f32.mrb[0].mxu0
  %v1526 = vadd.f32 %v1376, %v1525
  %v1527 = vpop.f32.mrb[0].mxu0
  %v1528 = vpop.f32.mrb[0].mxu0
  %v1529 = vadd.f32 %v1381, %v1528
  %v1530 = vpop.f32.mrb[0].mxu0
  %1531 = vmatprep.mubr.bf16.mxu0 0
  %1532 = vmatmul.mubr.bf16.gmra.mrb[0].mxu0 %v1441
  %v1533 = vpop.f32.mrb[0].mxu0
  %v1534 = vadd.f32 %v1386, %v1533
  %v1535 = vpop.f32.mrb[0].mxu0
  %v1536 = vpop.f32.mrb[0].mxu0
  %v1537 = vadd.f32 %v1391, %v1536
  %v1538 = vpop.f32.mrb[0].mxu0
  %1539 = vmatprep.mubr.bf16.mxu0 0
  %1540 = vmatmul.mubr.bf16.gmra.mrb[0].mxu0 %v1442
  %v1541 = vpop.f32.mrb[0].mxu0
  %v1542 = vadd.f32 %v1396, %v1541
  %v1543 = vpop.f32.mrb[0].mxu0
  %v1544 = vpop.f32.mrb[0].mxu0
  %v1545 = vadd.f32 %v1401, %v1544
  %v1546 = vpop.f32.mrb[0].mxu0
  %1547 = vdwg.mxu0
  %v1548 = vpack.c.bf16 %v1489, %v1486
  %v1549 = vpack.c.bf16 %v1497, %v1494
  %v1550 = vpack.c.bf16 %v1505, %v1502
  %v1551 = vpack.c.bf16 %v1513, %v1510
  %v1552 = vpack.c.bf16 %v1521, %v1518
  %v1553 = vpack.c.bf16 %v1529, %v1526
  %v1554 = vpack.c.bf16 %v1537, %v1534
  %v1555 = vpack.c.bf16 %v1545, %v1542
  %v1556 = vtanh.bf16.pop %v1548
  %v1557 = vtanh.bf16.pop %v1549
  %v1558 = vtanh.bf16.pop %v1550
  %v1559 = vtanh.bf16.pop %v1551
  %v1560 = vtanh.bf16.pop %v1552
  %v1561 = vtanh.bf16.pop %v1553
  %v1562 = vtanh.bf16.pop %v1554
  %v1563 = vtanh.bf16.pop %v1555
  %s1564 = scalar_lea.vmem %s2, 256
  %v1565 = vld [vmem:[%s1564] sm:$0xf]
  %v1566 = vld [vmem:[%s1564 + $0x4] sm:$0xf]
  %v1567 = vld [vmem:[%s1564 + $0x8] sm:$0xf]
  %v1568 = vld [vmem:[%s1564 + $0xc] sm:$0xf]
  %v1569 = vld [vmem:[%s1564 + $0x10] sm:$0xf]
  %v1570 = vld [vmem:[%s1564 + $0x14] sm:$0xf]
  %v1571 = vld [vmem:[%s1564 + $0x18] sm:$0xf]
  %v1572 = vld [vmem:[%s1564 + $0x1c] sm:$0xf]
  %v1573 = vld [vmem:[%s1564 + $0x20] sm:$0xf]
  %v1574 = vld [vmem:[%s1564 + $0x24] sm:$0xf]
  %v1575 = vld [vmem:[%s1564 + $0x28] sm:$0xf]
  %v1576 = vld [vmem:[%s1564 + $0x2c] sm:$0xf]
  %v1577 = vld [vmem:[%s1564 + $0x30] sm:$0xf]
  %v1578 = vld [vmem:[%s1564 + $0x34] sm:$0xf]
  %v1579 = vld [vmem:[%s1564 + $0x38] sm:$0xf]
  %v1580 = vld [vmem:[%s1564 + $0x3c] sm:$0xf]
  %s1581 = scalar_lea.vmem %s3, 640
  %v1582 = vld [vmem:[%s1581] sm:$0xff]
  %v1583 = vld [vmem:[%s1581 + $0x8] sm:$0xff]
  %v1584 = vld [vmem:[%s1581 + $0x10] sm:$0xff]
  %v1585 = vld [vmem:[%s1581 + $0x18] sm:$0xff]
  %v1586 = vld [vmem:[%s1581 + $0x20] sm:$0xff]
  %v1587 = vld [vmem:[%s1581 + $0x28] sm:$0xff]
  %v1588 = vld [vmem:[%s1581 + $0x30] sm:$0xff]
  %v1589 = vld [vmem:[%s1581 + $0x38] sm:$0xff]
  %v1590 = vld [vmem:[%s1581 + $0x40] sm:$0xff]
  %v1591 = vld [vmem:[%s1581 + $0x48] sm:$0xff]
  %v1592 = vld [vmem:[%s1581 + $0x50] sm:$0xff]
  %v1593 = vld [vmem:[%s1581 + $0x58] sm:$0xff]
  %v1594 = vld [vmem:[%s1581 + $0x60] sm:$0xff]
  %v1595 = vld [vmem:[%s1581 + $0x68] sm:$0xff]
  %v1596 = vld [vmem:[%s1581 + $0x70] sm:$0xff]
  %v1597 = vld [vmem:[%s1581 + $0x78] sm:$0xff]
  %1599 = vset.pattern.permute.xlu0 0
  %1600 = vperm.xlu0 %1599, %v1582
  %v1601 = vpop.permute.xlu0 %1600
  %1604 = vset.pattern.permute.xlu0 0
  %1605 = vperm.xlu0 %1604, %v1583
  %v1606 = vpop.permute.xlu0 %1605
  %1609 = vset.pattern.permute.xlu0 0
  %1610 = vperm.xlu0 %1609, %v1584
  %v1611 = vpop.permute.xlu0 %1610
  %1614 = vset.pattern.permute.xlu0 0
  %1615 = vperm.xlu0 %1614, %v1585
  %v1616 = vpop.permute.xlu0 %1615
  %1619 = vset.pattern.permute.xlu0 0
  %1620 = vperm.xlu0 %1619, %v1586
  %v1621 = vpop.permute.xlu0 %1620
  %1624 = vset.pattern.permute.xlu0 0
  %1625 = vperm.xlu0 %1624, %v1587
  %v1626 = vpop.permute.xlu0 %1625
  %1629 = vset.pattern.permute.xlu0 0
  %1630 = vperm.xlu0 %1629, %v1588
  %v1631 = vpop.permute.xlu0 %1630
  %1634 = vset.pattern.permute.xlu0 0
  %1635 = vperm.xlu0 %1634, %v1589
  %v1636 = vpop.permute.xlu0 %1635
  %1639 = vset.pattern.permute.xlu0 0
  %1640 = vperm.xlu0 %1639, %v1590
  %v1641 = vpop.permute.xlu0 %1640
  %1644 = vset.pattern.permute.xlu0 0
  %1645 = vperm.xlu0 %1644, %v1591
  %v1646 = vpop.permute.xlu0 %1645
  %1649 = vset.pattern.permute.xlu0 0
  %1650 = vperm.xlu0 %1649, %v1592
  %v1651 = vpop.permute.xlu0 %1650
  %1654 = vset.pattern.permute.xlu0 0
  %1655 = vperm.xlu0 %1654, %v1593
  %v1656 = vpop.permute.xlu0 %1655
  %1659 = vset.pattern.permute.xlu0 0
  %1660 = vperm.xlu0 %1659, %v1594
  %v1661 = vpop.permute.xlu0 %1660
  %1664 = vset.pattern.permute.xlu0 0
  %1665 = vperm.xlu0 %1664, %v1595
  %v1666 = vpop.permute.xlu0 %1665
  %1669 = vset.pattern.permute.xlu0 0
  %1670 = vperm.xlu0 %1669, %v1596
  %v1671 = vpop.permute.xlu0 %1670
  %1674 = vset.pattern.permute.xlu0 0
  %1675 = vperm.xlu0 %1674, %v1597
  %v1676 = vpop.permute.xlu0 %1675
  %v1694 = vunpack.c.l.b16 %v1565
  %v1695 = vunpack.c.l.b16 %v1566
  %v1696 = vunpack.c.l.b16 %v1567
  %v1697 = vunpack.c.l.b16 %v1568
  %v1698 = vunpack.c.l.b16 %v1569
  %v1699 = vunpack.c.l.b16 %v1570
  %v1700 = vunpack.c.l.b16 %v1571
  %v1701 = vunpack.c.l.b16 %v1572
  %v1702 = vunpack.c.l.b16 %v1573
  %v1703 = vunpack.c.l.b16 %v1574
  %v1704 = vunpack.c.l.b16 %v1575
  %v1705 = vunpack.c.l.b16 %v1576
  %v1706 = vunpack.c.l.b16 %v1577
  %v1707 = vunpack.c.l.b16 %v1578
  %v1708 = vunpack.c.l.b16 %v1579
  %v1709 = vunpack.c.l.b16 %v1580
  %v1710 = vpack.c.b16 %v1695, %v1694
  %v1711 = vpack.c.b16 %v1697, %v1696
  %v1712 = vpack.c.b16 %v1699, %v1698
  %v1713 = vpack.c.b16 %v1701, %v1700
  %v1714 = vpack.c.b16 %v1703, %v1702
  %v1715 = vpack.c.b16 %v1705, %v1704
  %v1716 = vpack.c.b16 %v1707, %v1706
  %v1717 = vpack.c.b16 %v1709, %v1708
  %1726 = vmatprep.subr.bf16.mxu0 0
  %1727 = vmatpush1.bf16.msra.mxu0 %v1556
  %1728 = vmatprep.subr.bf16.mxu0 0
  %1729 = vmatpush1.bf16.msra.mxu0 %v1557
  %1730 = vmatprep.subr.bf16.mxu0 0
  %1731 = vmatpush1.bf16.msra.mxu0 %v1558
  %1732 = vmatprep.subr.bf16.mxu0 0
  %1733 = vmatpush1.bf16.msra.mxu0 %v1559
  %1734 = vmatprep.subr.bf16.mxu0 0
  %1735 = vmatpush1.bf16.msra.mxu0 %v1560
  %1736 = vmatprep.subr.bf16.mxu0 0
  %1737 = vmatpush1.bf16.msra.mxu0 %v1561
  %1738 = vmatprep.subr.bf16.mxu0 0
  %1739 = vmatpush1.bf16.msra.mxu0 %v1562
  %1740 = vmatprep.subr.bf16.mxu0 0
  %1741 = vmatpush1.bf16.msra.mxu0 %v1563
  %1742 = vmatprep.subr.bf16.mxu0 0
  %1743 = vmatpush1.bf16.msra.mxu0 0
  %1744 = vmatprep.subr.bf16.mxu0 0
  %1745 = vmatpush1.bf16.msra.mxu0 0
  %1746 = vmatprep.subr.bf16.mxu0 0
  %1747 = vmatpush1.bf16.msra.mxu0 0
  %1748 = vmatprep.subr.bf16.mxu0 0
  %1749 = vmatpush1.bf16.msra.mxu0 0
  %1750 = vmatprep.subr.bf16.mxu0 0
  %1751 = vmatpush1.bf16.msra.mxu0 0
  %1752 = vmatprep.subr.bf16.mxu0 0
  %1753 = vmatpush1.bf16.msra.mxu0 0
  %1754 = vmatprep.subr.bf16.mxu0 0
  %1755 = vmatpush1.bf16.msra.mxu0 0
  %1756 = vmatprep.subr.bf16.mxu0 0
  %1757 = vmatpush1.bf16.msra.mxu0 0
  %1758 = vmatprep.mubr.bf16.mxu0 0
  %1759 = vmatmul.mubr.bf16.gmra.mrb[0].mxu0 %v1710
  %v1760 = vpop.f32.mrb[0].mxu0
  %v1761 = vadd.f32 %v1601, %v1760
  %v1762 = vpop.f32.mrb[0].mxu0
  %v1763 = vpop.f32.mrb[0].mxu0
  %v1764 = vadd.f32 %v1606, %v1763
  %v1765 = vpop.f32.mrb[0].mxu0
  %1766 = vmatprep.mubr.bf16.mxu0 0
  %1767 = vmatmul.mubr.bf16.gmra.mrb[0].mxu0 %v1711
  %v1768 = vpop.f32.mrb[0].mxu0
  %v1769 = vadd.f32 %v1611, %v1768
  %v1770 = vpop.f32.mrb[0].mxu0
  %v1771 = vpop.f32.mrb[0].mxu0
  %v1772 = vadd.f32 %v1616, %v1771
  %v1773 = vpop.f32.mrb[0].mxu0
  %1774 = vmatprep.mubr.bf16.mxu0 0
  %1775 = vmatmul.mubr.bf16.gmra.mrb[0].mxu0 %v1712
  %v1776 = vpop.f32.mrb[0].mxu0
  %v1777 = vadd.f32 %v1621, %v1776
  %v1778 = vpop.f32.mrb[0].mxu0
  %v1779 = vpop.f32.mrb[0].mxu0
  %v1780 = vadd.f32 %v1626, %v1779
  %v1781 = vpop.f32.mrb[0].mxu0
  %1782 = vmatprep.mubr.bf16.mxu0 0
  %1783 = vmatmul.mubr.bf16.gmra.mrb[0].mxu0 %v1713
  %v1784 = vpop.f32.mrb[0].mxu0
  %v1785 = vadd.f32 %v1631, %v1784
  %v1786 = vpop.f32.mrb[0].mxu0
  %v1787 = vpop.f32.mrb[0].mxu0
  %v1788 = vadd.f32 %v1636, %v1787
  %v1789 = vpop.f32.mrb[0].mxu0
  %1790 = vmatprep.mubr.bf16.mxu0 0
  %1791 = vmatmul.mubr.bf16.gmra.mrb[0].mxu0 %v1714
  %v1792 = vpop.f32.mrb[0].mxu0
  %v1793 = vadd.f32 %v1641, %v1792
  %v1794 = vpop.f32.mrb[0].mxu0
  %v1795 = vpop.f32.mrb[0].mxu0
  %v1796 = vadd.f32 %v1646, %v1795
  %v1797 = vpop.f32.mrb[0].mxu0
  %1798 = vmatprep.mubr.bf16.mxu0 0
  %1799 = vmatmul.mubr.bf16.gmra.mrb[0].mxu0 %v1715
  %v1800 = vpop.f32.mrb[0].mxu0
  %v1801 = vadd.f32 %v1651, %v1800
  %v1802 = vpop.f32.mrb[0].mxu0
  %v1803 = vpop.f32.mrb[0].mxu0
  %v1804 = vadd.f32 %v1656, %v1803
  %v1805 = vpop.f32.mrb[0].mxu0
  %1806 = vmatprep.mubr.bf16.mxu0 0
  %1807 = vmatmul.mubr.bf16.gmra.mrb[0].mxu0 %v1716
  %v1808 = vpop.f32.mrb[0].mxu0
  %v1809 = vadd.f32 %v1661, %v1808
  %v1810 = vpop.f32.mrb[0].mxu0
  %v1811 = vpop.f32.mrb[0].mxu0
  %v1812 = vadd.f32 %v1666, %v1811
  %v1813 = vpop.f32.mrb[0].mxu0
  %1814 = vmatprep.mubr.bf16.mxu0 0
  %1815 = vmatmul.mubr.bf16.gmra.mrb[0].mxu0 %v1717
  %v1816 = vpop.f32.mrb[0].mxu0
  %v1817 = vadd.f32 %v1671, %v1816
  %v1818 = vpop.f32.mrb[0].mxu0
  %v1819 = vpop.f32.mrb[0].mxu0
  %v1820 = vadd.f32 %v1676, %v1819
  %v1821 = vpop.f32.mrb[0].mxu0
  %1822 = vdwg.mxu0
  %v1823 = vpack.c.bf16 %v1764, %v1761
  %v1824 = vpack.c.bf16 %v1772, %v1769
  %v1825 = vpack.c.bf16 %v1780, %v1777
  %v1826 = vpack.c.bf16 %v1788, %v1785
  %v1827 = vpack.c.bf16 %v1796, %v1793
  %v1828 = vpack.c.bf16 %v1804, %v1801
  %v1829 = vpack.c.bf16 %v1812, %v1809
  %v1830 = vpack.c.bf16 %v1820, %v1817
  %v1831 = vtanh.bf16.pop %v1823
  %v1832 = vtanh.bf16.pop %v1824
  %v1833 = vtanh.bf16.pop %v1825
  %v1834 = vtanh.bf16.pop %v1826
  %v1835 = vtanh.bf16.pop %v1827
  %v1836 = vtanh.bf16.pop %v1828
  %v1837 = vtanh.bf16.pop %v1829
  %v1838 = vtanh.bf16.pop %v1830
  %s1839 = scalar_lea.vmem %s2, 320
  %v1840 = vld [vmem:[%s1839] sm:$0xf]
  %v1841 = vld [vmem:[%s1839 + $0x4] sm:$0xf]
  %v1842 = vld [vmem:[%s1839 + $0x8] sm:$0xf]
  %v1843 = vld [vmem:[%s1839 + $0xc] sm:$0xf]
  %v1844 = vld [vmem:[%s1839 + $0x10] sm:$0xf]
  %v1845 = vld [vmem:[%s1839 + $0x14] sm:$0xf]
  %v1846 = vld [vmem:[%s1839 + $0x18] sm:$0xf]
  %v1847 = vld [vmem:[%s1839 + $0x1c] sm:$0xf]
  %v1848 = vld [vmem:[%s1839 + $0x20] sm:$0xf]
  %v1849 = vld [vmem:[%s1839 + $0x24] sm:$0xf]
  %v1850 = vld [vmem:[%s1839 + $0x28] sm:$0xf]
  %v1851 = vld [vmem:[%s1839 + $0x2c] sm:$0xf]
  %v1852 = vld [vmem:[%s1839 + $0x30] sm:$0xf]
  %v1853 = vld [vmem:[%s1839 + $0x34] sm:$0xf]
  %v1854 = vld [vmem:[%s1839 + $0x38] sm:$0xf]
  %v1855 = vld [vmem:[%s1839 + $0x3c] sm:$0xf]
  %s1856 = scalar_lea.vmem %s3, 768
  %v1857 = vld [vmem:[%s1856] sm:$0xff]
  %v1858 = vld [vmem:[%s1856 + $0x8] sm:$0xff]
  %v1859 = vld [vmem:[%s1856 + $0x10] sm:$0xff]
  %v1860 = vld [vmem:[%s1856 + $0x18] sm:$0xff]
  %v1861 = vld [vmem:[%s1856 + $0x20] sm:$0xff]
  %v1862 = vld [vmem:[%s1856 + $0x28] sm:$0xff]
  %v1863 = vld [vmem:[%s1856 + $0x30] sm:$0xff]
  %v1864 = vld [vmem:[%s1856 + $0x38] sm:$0xff]
  %v1865 = vld [vmem:[%s1856 + $0x40] sm:$0xff]
  %v1866 = vld [vmem:[%s1856 + $0x48] sm:$0xff]
  %v1867 = vld [vmem:[%s1856 + $0x50] sm:$0xff]
  %v1868 = vld [vmem:[%s1856 + $0x58] sm:$0xff]
  %v1869 = vld [vmem:[%s1856 + $0x60] sm:$0xff]
  %v1870 = vld [vmem:[%s1856 + $0x68] sm:$0xff]
  %v1871 = vld [vmem:[%s1856 + $0x70] sm:$0xff]
  %v1872 = vld [vmem:[%s1856 + $0x78] sm:$0xff]
  %1874 = vset.pattern.permute.xlu0 0
  %1875 = vperm.xlu0 %1874, %v1857
  %v1876 = vpop.permute.xlu0 %1875
  %1879 = vset.pattern.permute.xlu0 0
  %1880 = vperm.xlu0 %1879, %v1858
  %v1881 = vpop.permute.xlu0 %1880
  %1884 = vset.pattern.permute.xlu0 0
  %1885 = vperm.xlu0 %1884, %v1859
  %v1886 = vpop.permute.xlu0 %1885
  %1889 = vset.pattern.permute.xlu0 0
  %1890 = vperm.xlu0 %1889, %v1860
  %v1891 = vpop.permute.xlu0 %1890
  %1894 = vset.pattern.permute.xlu0 0
  %1895 = vperm.xlu0 %1894, %v1861
  %v1896 = vpop.permute.xlu0 %1895
  %1899 = vset.pattern.permute.xlu0 0
  %1900 = vperm.xlu0 %1899, %v1862
  %v1901 = vpop.permute.xlu0 %1900
  %1904 = vset.pattern.permute.xlu0 0
  %1905 = vperm.xlu0 %1904, %v1863
  %v1906 = vpop.permute.xlu0 %1905
  %1909 = vset.pattern.permute.xlu0 0
  %1910 = vperm.xlu0 %1909, %v1864
  %v1911 = vpop.permute.xlu0 %1910
  %1914 = vset.pattern.permute.xlu0 0
  %1915 = vperm.xlu0 %1914, %v1865
  %v1916 = vpop.permute.xlu0 %1915
  %1919 = vset.pattern.permute.xlu0 0
  %1920 = vperm.xlu0 %1919, %v1866
  %v1921 = vpop.permute.xlu0 %1920
  %1924 = vset.pattern.permute.xlu0 0
  %1925 = vperm.xlu0 %1924, %v1867
  %v1926 = vpop.permute.xlu0 %1925
  %1929 = vset.pattern.permute.xlu0 0
  %1930 = vperm.xlu0 %1929, %v1868
  %v1931 = vpop.permute.xlu0 %1930
  %1934 = vset.pattern.permute.xlu0 0
  %1935 = vperm.xlu0 %1934, %v1869
  %v1936 = vpop.permute.xlu0 %1935
  %1939 = vset.pattern.permute.xlu0 0
  %1940 = vperm.xlu0 %1939, %v1870
  %v1941 = vpop.permute.xlu0 %1940
  %1944 = vset.pattern.permute.xlu0 0
  %1945 = vperm.xlu0 %1944, %v1871
  %v1946 = vpop.permute.xlu0 %1945
  %1949 = vset.pattern.permute.xlu0 0
  %1950 = vperm.xlu0 %1949, %v1872
  %v1951 = vpop.permute.xlu0 %1950
  %v1969 = vunpack.c.l.b16 %v1840
  %v1970 = vunpack.c.l.b16 %v1841
  %v1971 = vunpack.c.l.b16 %v1842
  %v1972 = vunpack.c.l.b16 %v1843
  %v1973 = vunpack.c.l.b16 %v1844
  %v1974 = vunpack.c.l.b16 %v1845
  %v1975 = vunpack.c.l.b16 %v1846
  %v1976 = vunpack.c.l.b16 %v1847
  %v1977 = vunpack.c.l.b16 %v1848
  %v1978 = vunpack.c.l.b16 %v1849
  %v1979 = vunpack.c.l.b16 %v1850
  %v1980 = vunpack.c.l.b16 %v1851
  %v1981 = vunpack.c.l.b16 %v1852
  %v1982 = vunpack.c.l.b16 %v1853
  %v1983 = vunpack.c.l.b16 %v1854
  %v1984 = vunpack.c.l.b16 %v1855
  %v1985 = vpack.c.b16 %v1970, %v1969
  %v1986 = vpack.c.b16 %v1972, %v1971
  %v1987 = vpack.c.b16 %v1974, %v1973
  %v1988 = vpack.c.b16 %v1976, %v1975
  %v1989 = vpack.c.b16 %v1978, %v1977
  %v1990 = vpack.c.b16 %v1980, %v1979
  %v1991 = vpack.c.b16 %v1982, %v1981
  %v1992 = vpack.c.b16 %v1984, %v1983
  %2001 = vmatprep.subr.bf16.mxu0 0
  %2002 = vmatpush1.bf16.msra.mxu0 %v1831
  %2003 = vmatprep.subr.bf16.mxu0 0
  %2004 = vmatpush1.bf16.msra.mxu0 %v1832
  %2005 = vmatprep.subr.bf16.mxu0 0
  %2006 = vmatpush1.bf16.msra.mxu0 %v1833
  %2007 = vmatprep.subr.bf16.mxu0 0
  %2008 = vmatpush1.bf16.msra.mxu0 %v1834
  %2009 = vmatprep.subr.bf16.mxu0 0
  %2010 = vmatpush1.bf16.msra.mxu0 %v1835
  %2011 = vmatprep.subr.bf16.mxu0 0
  %2012 = vmatpush1.bf16.msra.mxu0 %v1836
  %2013 = vmatprep.subr.bf16.mxu0 0
  %2014 = vmatpush1.bf16.msra.mxu0 %v1837
  %2015 = vmatprep.subr.bf16.mxu0 0
  %2016 = vmatpush1.bf16.msra.mxu0 %v1838
  %2017 = vmatprep.subr.bf16.mxu0 0
  %2018 = vmatpush1.bf16.msra.mxu0 0
  %2019 = vmatprep.subr.bf16.mxu0 0
  %2020 = vmatpush1.bf16.msra.mxu0 0
  %2021 = vmatprep.subr.bf16.mxu0 0
  %2022 = vmatpush1.bf16.msra.mxu0 0
  %2023 = vmatprep.subr.bf16.mxu0 0
  %2024 = vmatpush1.bf16.msra.mxu0 0
  %2025 = vmatprep.subr.bf16.mxu0 0
  %2026 = vmatpush1.bf16.msra.mxu0 0
  %2027 = vmatprep.subr.bf16.mxu0 0
  %2028 = vmatpush1.bf16.msra.mxu0 0
  %2029 = vmatprep.subr.bf16.mxu0 0
  %2030 = vmatpush1.bf16.msra.mxu0 0
  %2031 = vmatprep.subr.bf16.mxu0 0
  %2032 = vmatpush1.bf16.msra.mxu0 0
  %2033 = vmatprep.mubr.bf16.mxu0 0
  %2034 = vmatmul.mubr.bf16.gmra.mrb[0].mxu0 %v1985
  %v2035 = vpop.f32.mrb[0].mxu0
  %v2036 = vadd.f32 %v1876, %v2035
  %v2037 = vpop.f32.mrb[0].mxu0
  %v2038 = vpop.f32.mrb[0].mxu0
  %v2039 = vadd.f32 %v1881, %v2038
  %v2040 = vpop.f32.mrb[0].mxu0
  %2041 = vmatprep.mubr.bf16.mxu0 0
  %2042 = vmatmul.mubr.bf16.gmra.mrb[0].mxu0 %v1986
  %v2043 = vpop.f32.mrb[0].mxu0
  %v2044 = vadd.f32 %v1886, %v2043
  %v2045 = vpop.f32.mrb[0].mxu0
  %v2046 = vpop.f32.mrb[0].mxu0
  %v2047 = vadd.f32 %v1891, %v2046
  %v2048 = vpop.f32.mrb[0].mxu0
  %2049 = vmatprep.mubr.bf16.mxu0 0
  %2050 = vmatmul.mubr.bf16.gmra.mrb[0].mxu0 %v1987
  %v2051 = vpop.f32.mrb[0].mxu0
  %v2052 = vadd.f32 %v1896, %v2051
  %v2053 = vpop.f32.mrb[0].mxu0
  %v2054 = vpop.f32.mrb[0].mxu0
  %v2055 = vadd.f32 %v1901, %v2054
  %v2056 = vpop.f32.mrb[0].mxu0
  %2057 = vmatprep.mubr.bf16.mxu0 0
  %2058 = vmatmul.mubr.bf16.gmra.mrb[0].mxu0 %v1988
  %v2059 = vpop.f32.mrb[0].mxu0
  %v2060 = vadd.f32 %v1906, %v2059
  %v2061 = vpop.f32.mrb[0].mxu0
  %v2062 = vpop.f32.mrb[0].mxu0
  %v2063 = vadd.f32 %v1911, %v2062
  %v2064 = vpop.f32.mrb[0].mxu0
  %2065 = vmatprep.mubr.bf16.mxu0 0
  %2066 = vmatmul.mubr.bf16.gmra.mrb[0].mxu0 %v1989
  %v2067 = vpop.f32.mrb[0].mxu0
  %v2068 = vadd.f32 %v1916, %v2067
  %v2069 = vpop.f32.mrb[0].mxu0
  %v2070 = vpop.f32.mrb[0].mxu0
  %v2071 = vadd.f32 %v1921, %v2070
  %v2072 = vpop.f32.mrb[0].mxu0
  %2073 = vmatprep.mubr.bf16.mxu0 0
  %2074 = vmatmul.mubr.bf16.gmra.mrb[0].mxu0 %v1990
  %v2075 = vpop.f32.mrb[0].mxu0
  %v2076 = vadd.f32 %v1926, %v2075
  %v2077 = vpop.f32.mrb[0].mxu0
  %v2078 = vpop.f32.mrb[0].mxu0
  %v2079 = vadd.f32 %v1931, %v2078
  %v2080 = vpop.f32.mrb[0].mxu0
  %2081 = vmatprep.mubr.bf16.mxu0 0
  %2082 = vmatmul.mubr.bf16.gmra.mrb[0].mxu0 %v1991
  %v2083 = vpop.f32.mrb[0].mxu0
  %v2084 = vadd.f32 %v1936, %v2083
  %v2085 = vpop.f32.mrb[0].mxu0
  %v2086 = vpop.f32.mrb[0].mxu0
  %v2087 = vadd.f32 %v1941, %v2086
  %v2088 = vpop.f32.mrb[0].mxu0
  %2089 = vmatprep.mubr.bf16.mxu0 0
  %2090 = vmatmul.mubr.bf16.gmra.mrb[0].mxu0 %v1992
  %v2091 = vpop.f32.mrb[0].mxu0
  %v2092 = vadd.f32 %v1946, %v2091
  %v2093 = vpop.f32.mrb[0].mxu0
  %v2094 = vpop.f32.mrb[0].mxu0
  %v2095 = vadd.f32 %v1951, %v2094
  %v2096 = vpop.f32.mrb[0].mxu0
  %2097 = vdwg.mxu0
  %v2098 = vpack.c.bf16 %v2039, %v2036
  %v2099 = vpack.c.bf16 %v2047, %v2044
  %v2100 = vpack.c.bf16 %v2055, %v2052
  %v2101 = vpack.c.bf16 %v2063, %v2060
  %v2102 = vpack.c.bf16 %v2071, %v2068
  %v2103 = vpack.c.bf16 %v2079, %v2076
  %v2104 = vpack.c.bf16 %v2087, %v2084
  %v2105 = vpack.c.bf16 %v2095, %v2092
  %v2106 = vtanh.bf16.pop %v2098
  %v2107 = vtanh.bf16.pop %v2099
  %v2108 = vtanh.bf16.pop %v2100
  %v2109 = vtanh.bf16.pop %v2101
  %v2110 = vtanh.bf16.pop %v2102
  %v2111 = vtanh.bf16.pop %v2103
  %v2112 = vtanh.bf16.pop %v2104
  %v2113 = vtanh.bf16.pop %v2105
  %s2114 = scalar_lea.vmem %s2, 384
  %v2115 = vld [vmem:[%s2114] sm:$0xf]
  %v2116 = vld [vmem:[%s2114 + $0x4] sm:$0xf]
  %v2117 = vld [vmem:[%s2114 + $0x8] sm:$0xf]
  %v2118 = vld [vmem:[%s2114 + $0xc] sm:$0xf]
  %v2119 = vld [vmem:[%s2114 + $0x10] sm:$0xf]
  %v2120 = vld [vmem:[%s2114 + $0x14] sm:$0xf]
  %v2121 = vld [vmem:[%s2114 + $0x18] sm:$0xf]
  %v2122 = vld [vmem:[%s2114 + $0x1c] sm:$0xf]
  %v2123 = vld [vmem:[%s2114 + $0x20] sm:$0xf]
  %v2124 = vld [vmem:[%s2114 + $0x24] sm:$0xf]
  %v2125 = vld [vmem:[%s2114 + $0x28] sm:$0xf]
  %v2126 = vld [vmem:[%s2114 + $0x2c] sm:$0xf]
  %v2127 = vld [vmem:[%s2114 + $0x30] sm:$0xf]
  %v2128 = vld [vmem:[%s2114 + $0x34] sm:$0xf]
  %v2129 = vld [vmem:[%s2114 + $0x38] sm:$0xf]
  %v2130 = vld [vmem:[%s2114 + $0x3c] sm:$0xf]
  %s2131 = scalar_lea.vmem %s3, 896
  %v2132 = vld [vmem:[%s2131] sm:$0xff]
  %v2133 = vld [vmem:[%s2131 + $0x8] sm:$0xff]
  %v2134 = vld [vmem:[%s2131 + $0x10] sm:$0xff]
  %v2135 = vld [vmem:[%s2131 + $0x18] sm:$0xff]
  %v2136 = vld [vmem:[%s2131 + $0x20] sm:$0xff]
  %v2137 = vld [vmem:[%s2131 + $0x28] sm:$0xff]
  %v2138 = vld [vmem:[%s2131 + $0x30] sm:$0xff]
  %v2139 = vld [vmem:[%s2131 + $0x38] sm:$0xff]
  %v2140 = vld [vmem:[%s2131 + $0x40] sm:$0xff]
  %v2141 = vld [vmem:[%s2131 + $0x48] sm:$0xff]
  %v2142 = vld [vmem:[%s2131 + $0x50] sm:$0xff]
  %v2143 = vld [vmem:[%s2131 + $0x58] sm:$0xff]
  %v2144 = vld [vmem:[%s2131 + $0x60] sm:$0xff]
  %v2145 = vld [vmem:[%s2131 + $0x68] sm:$0xff]
  %v2146 = vld [vmem:[%s2131 + $0x70] sm:$0xff]
  %v2147 = vld [vmem:[%s2131 + $0x78] sm:$0xff]
  %2149 = vset.pattern.permute.xlu0 0
  %2150 = vperm.xlu0 %2149, %v2132
  %v2151 = vpop.permute.xlu0 %2150
  %2154 = vset.pattern.permute.xlu0 0
  %2155 = vperm.xlu0 %2154, %v2133
  %v2156 = vpop.permute.xlu0 %2155
  %2159 = vset.pattern.permute.xlu0 0
  %2160 = vperm.xlu0 %2159, %v2134
  %v2161 = vpop.permute.xlu0 %2160
  %2164 = vset.pattern.permute.xlu0 0
  %2165 = vperm.xlu0 %2164, %v2135
  %v2166 = vpop.permute.xlu0 %2165
  %2169 = vset.pattern.permute.xlu0 0
  %2170 = vperm.xlu0 %2169, %v2136
  %v2171 = vpop.permute.xlu0 %2170
  %2174 = vset.pattern.permute.xlu0 0
  %2175 = vperm.xlu0 %2174, %v2137
  %v2176 = vpop.permute.xlu0 %2175
  %2179 = vset.pattern.permute.xlu0 0
  %2180 = vperm.xlu0 %2179, %v2138
  %v2181 = vpop.permute.xlu0 %2180
  %2184 = vset.pattern.permute.xlu0 0
  %2185 = vperm.xlu0 %2184, %v2139
  %v2186 = vpop.permute.xlu0 %2185
  %2189 = vset.pattern.permute.xlu0 0
  %2190 = vperm.xlu0 %2189, %v2140
  %v2191 = vpop.permute.xlu0 %2190
  %2194 = vset.pattern.permute.xlu0 0
  %2195 = vperm.xlu0 %2194, %v2141
  %v2196 = vpop.permute.xlu0 %2195
  %2199 = vset.pattern.permute.xlu0 0
  %2200 = vperm.xlu0 %2199, %v2142
  %v2201 = vpop.permute.xlu0 %2200
  %2204 = vset.pattern.permute.xlu0 0
  %2205 = vperm.xlu0 %2204, %v2143
  %v2206 = vpop.permute.xlu0 %2205
  %2209 = vset.pattern.permute.xlu0 0
  %2210 = vperm.xlu0 %2209, %v2144
  %v2211 = vpop.permute.xlu0 %2210
  %2214 = vset.pattern.permute.xlu0 0
  %2215 = vperm.xlu0 %2214, %v2145
  %v2216 = vpop.permute.xlu0 %2215
  %2219 = vset.pattern.permute.xlu0 0
  %2220 = vperm.xlu0 %2219, %v2146
  %v2221 = vpop.permute.xlu0 %2220
  %2224 = vset.pattern.permute.xlu0 0
  %2225 = vperm.xlu0 %2224, %v2147
  %v2226 = vpop.permute.xlu0 %2225
  %v2244 = vunpack.c.l.b16 %v2115
  %v2245 = vunpack.c.l.b16 %v2116
  %v2246 = vunpack.c.l.b16 %v2117
  %v2247 = vunpack.c.l.b16 %v2118
  %v2248 = vunpack.c.l.b16 %v2119
  %v2249 = vunpack.c.l.b16 %v2120
  %v2250 = vunpack.c.l.b16 %v2121
  %v2251 = vunpack.c.l.b16 %v2122
  %v2252 = vunpack.c.l.b16 %v2123
  %v2253 = vunpack.c.l.b16 %v2124
  %v2254 = vunpack.c.l.b16 %v2125
  %v2255 = vunpack.c.l.b16 %v2126
  %v2256 = vunpack.c.l.b16 %v2127
  %v2257 = vunpack.c.l.b16 %v2128
  %v2258 = vunpack.c.l.b16 %v2129
  %v2259 = vunpack.c.l.b16 %v2130
  %v2260 = vpack.c.b16 %v2245, %v2244
  %v2261 = vpack.c.b16 %v2247, %v2246
  %v2262 = vpack.c.b16 %v2249, %v2248
  %v2263 = vpack.c.b16 %v2251, %v2250
  %v2264 = vpack.c.b16 %v2253, %v2252
  %v2265 = vpack.c.b16 %v2255, %v2254
  %v2266 = vpack.c.b16 %v2257, %v2256
  %v2267 = vpack.c.b16 %v2259, %v2258
  %2276 = vmatprep.subr.bf16.mxu0 0
  %2277 = vmatpush1.bf16.msra.mxu0 %v2106
  %2278 = vmatprep.subr.bf16.mxu0 0
  %2279 = vmatpush1.bf16.msra.mxu0 %v2107
  %2280 = vmatprep.subr.bf16.mxu0 0
  %2281 = vmatpush1.bf16.msra.mxu0 %v2108
  %2282 = vmatprep.subr.bf16.mxu0 0
  %2283 = vmatpush1.bf16.msra.mxu0 %v2109
  %2284 = vmatprep.subr.bf16.mxu0 0
  %2285 = vmatpush1.bf16.msra.mxu0 %v2110
  %2286 = vmatprep.subr.bf16.mxu0 0
  %2287 = vmatpush1.bf16.msra.mxu0 %v2111
  %2288 = vmatprep.subr.bf16.mxu0 0
  %2289 = vmatpush1.bf16.msra.mxu0 %v2112
  %2290 = vmatprep.subr.bf16.mxu0 0
  %2291 = vmatpush1.bf16.msra.mxu0 %v2113
  %2292 = vmatprep.subr.bf16.mxu0 0
  %2293 = vmatpush1.bf16.msra.mxu0 0
  %2294 = vmatprep.subr.bf16.mxu0 0
  %2295 = vmatpush1.bf16.msra.mxu0 0
  %2296 = vmatprep.subr.bf16.mxu0 0
  %2297 = vmatpush1.bf16.msra.mxu0 0
  %2298 = vmatprep.subr.bf16.mxu0 0
  %2299 = vmatpush1.bf16.msra.mxu0 0
  %2300 = vmatprep.subr.bf16.mxu0 0
  %2301 = vmatpush1.bf16.msra.mxu0 0
  %2302 = vmatprep.subr.bf16.mxu0 0
  %2303 = vmatpush1.bf16.msra.mxu0 0
  %2304 = vmatprep.subr.bf16.mxu0 0
  %2305 = vmatpush1.bf16.msra.mxu0 0
  %2306 = vmatprep.subr.bf16.mxu0 0
  %2307 = vmatpush1.bf16.msra.mxu0 0
  %2308 = vmatprep.mubr.bf16.mxu0 0
  %2309 = vmatmul.mubr.bf16.gmra.mrb[0].mxu0 %v2260
  %v2310 = vpop.f32.mrb[0].mxu0
  %v2311 = vadd.f32 %v2151, %v2310
  %v2312 = vpop.f32.mrb[0].mxu0
  %v2313 = vpop.f32.mrb[0].mxu0
  %v2314 = vadd.f32 %v2156, %v2313
  %v2315 = vpop.f32.mrb[0].mxu0
  %2316 = vmatprep.mubr.bf16.mxu0 0
  %2317 = vmatmul.mubr.bf16.gmra.mrb[0].mxu0 %v2261
  %v2318 = vpop.f32.mrb[0].mxu0
  %v2319 = vadd.f32 %v2161, %v2318
  %v2320 = vpop.f32.mrb[0].mxu0
  %v2321 = vpop.f32.mrb[0].mxu0
  %v2322 = vadd.f32 %v2166, %v2321
  %v2323 = vpop.f32.mrb[0].mxu0
  %2324 = vmatprep.mubr.bf16.mxu0 0
  %2325 = vmatmul.mubr.bf16.gmra.mrb[0].mxu0 %v2262
  %v2326 = vpop.f32.mrb[0].mxu0
  %v2327 = vadd.f32 %v2171, %v2326
  %v2328 = vpop.f32.mrb[0].mxu0
  %v2329 = vpop.f32.mrb[0].mxu0
  %v2330 = vadd.f32 %v2176, %v2329
  %v2331 = vpop.f32.mrb[0].mxu0
  %2332 = vmatprep.mubr.bf16.mxu0 0
  %2333 = vmatmul.mubr.bf16.gmra.mrb[0].mxu0 %v2263
  %v2334 = vpop.f32.mrb[0].mxu0
  %v2335 = vadd.f32 %v2181, %v2334
  %v2336 = vpop.f32.mrb[0].mxu0
  %v2337 = vpop.f32.mrb[0].mxu0
  %v2338 = vadd.f32 %v2186, %v2337
  %v2339 = vpop.f32.mrb[0].mxu0
  %2340 = vmatprep.mubr.bf16.mxu0 0
  %2341 = vmatmul.mubr.bf16.gmra.mrb[0].mxu0 %v2264
  %v2342 = vpop.f32.mrb[0].mxu0
  %v2343 = vadd.f32 %v2191, %v2342
  %v2344 = vpop.f32.mrb[0].mxu0
  %v2345 = vpop.f32.mrb[0].mxu0
  %v2346 = vadd.f32 %v2196, %v2345
  %v2347 = vpop.f32.mrb[0].mxu0
  %2348 = vmatprep.mubr.bf16.mxu0 0
  %2349 = vmatmul.mubr.bf16.gmra.mrb[0].mxu0 %v2265
  %v2350 = vpop.f32.mrb[0].mxu0
  %v2351 = vadd.f32 %v2201, %v2350
  %v2352 = vpop.f32.mrb[0].mxu0
  %v2353 = vpop.f32.mrb[0].mxu0
  %v2354 = vadd.f32 %v2206, %v2353
  %v2355 = vpop.f32.mrb[0].mxu0
  %2356 = vmatprep.mubr.bf16.mxu0 0
  %2357 = vmatmul.mubr.bf16.gmra.mrb[0].mxu0 %v2266
  %v2358 = vpop.f32.mrb[0].mxu0
  %v2359 = vadd.f32 %v2211, %v2358
  %v2360 = vpop.f32.mrb[0].mxu0
  %v2361 = vpop.f32.mrb[0].mxu0
  %v2362 = vadd.f32 %v2216, %v2361
  %v2363 = vpop.f32.mrb[0].mxu0
  %2364 = vmatprep.mubr.bf16.mxu0 0
  %2365 = vmatmul.mubr.bf16.gmra.mrb[0].mxu0 %v2267
  %v2366 = vpop.f32.mrb[0].mxu0
  %v2367 = vadd.f32 %v2221, %v2366
  %v2368 = vpop.f32.mrb[0].mxu0
  %v2369 = vpop.f32.mrb[0].mxu0
  %v2370 = vadd.f32 %v2226, %v2369
  %v2371 = vpop.f32.mrb[0].mxu0
  %2372 = vdwg.mxu0
  %v2373 = vpack.c.bf16 %v2314, %v2311
  %v2374 = vpack.c.bf16 %v2322, %v2319
  %v2375 = vpack.c.bf16 %v2330, %v2327
  %v2376 = vpack.c.bf16 %v2338, %v2335
  %v2377 = vpack.c.bf16 %v2346, %v2343
  %v2378 = vpack.c.bf16 %v2354, %v2351
  %v2379 = vpack.c.bf16 %v2362, %v2359
  %v2380 = vpack.c.bf16 %v2370, %v2367
  %v2381 = vtanh.bf16.pop %v2373
  %v2382 = vtanh.bf16.pop %v2374
  %v2383 = vtanh.bf16.pop %v2375
  %v2384 = vtanh.bf16.pop %v2376
  %v2385 = vtanh.bf16.pop %v2377
  %v2386 = vtanh.bf16.pop %v2378
  %v2387 = vtanh.bf16.pop %v2379
  %v2388 = vtanh.bf16.pop %v2380
  %s2389 = scalar_lea.vmem %s2, 448
  %v2390 = vld [vmem:[%s2389] sm:$0xf]
  %v2391 = vld [vmem:[%s2389 + $0x4] sm:$0xf]
  %v2392 = vld [vmem:[%s2389 + $0x8] sm:$0xf]
  %v2393 = vld [vmem:[%s2389 + $0xc] sm:$0xf]
  %v2394 = vld [vmem:[%s2389 + $0x10] sm:$0xf]
  %v2395 = vld [vmem:[%s2389 + $0x14] sm:$0xf]
  %v2396 = vld [vmem:[%s2389 + $0x18] sm:$0xf]
  %v2397 = vld [vmem:[%s2389 + $0x1c] sm:$0xf]
  %v2398 = vld [vmem:[%s2389 + $0x20] sm:$0xf]
  %v2399 = vld [vmem:[%s2389 + $0x24] sm:$0xf]
  %v2400 = vld [vmem:[%s2389 + $0x28] sm:$0xf]
  %v2401 = vld [vmem:[%s2389 + $0x2c] sm:$0xf]
  %v2402 = vld [vmem:[%s2389 + $0x30] sm:$0xf]
  %v2403 = vld [vmem:[%s2389 + $0x34] sm:$0xf]
  %v2404 = vld [vmem:[%s2389 + $0x38] sm:$0xf]
  %v2405 = vld [vmem:[%s2389 + $0x3c] sm:$0xf]
  %s2406 = scalar_lea.vmem %s3, 1024
  %v2407 = vld [vmem:[%s2406] sm:$0xff]
  %v2408 = vld [vmem:[%s2406 + $0x8] sm:$0xff]
  %v2409 = vld [vmem:[%s2406 + $0x10] sm:$0xff]
  %v2410 = vld [vmem:[%s2406 + $0x18] sm:$0xff]
  %v2411 = vld [vmem:[%s2406 + $0x20] sm:$0xff]
  %v2412 = vld [vmem:[%s2406 + $0x28] sm:$0xff]
  %v2413 = vld [vmem:[%s2406 + $0x30] sm:$0xff]
  %v2414 = vld [vmem:[%s2406 + $0x38] sm:$0xff]
  %v2415 = vld [vmem:[%s2406 + $0x40] sm:$0xff]
  %v2416 = vld [vmem:[%s2406 + $0x48] sm:$0xff]
  %v2417 = vld [vmem:[%s2406 + $0x50] sm:$0xff]
  %v2418 = vld [vmem:[%s2406 + $0x58] sm:$0xff]
  %v2419 = vld [vmem:[%s2406 + $0x60] sm:$0xff]
  %v2420 = vld [vmem:[%s2406 + $0x68] sm:$0xff]
  %v2421 = vld [vmem:[%s2406 + $0x70] sm:$0xff]
  %v2422 = vld [vmem:[%s2406 + $0x78] sm:$0xff]
  %2424 = vset.pattern.permute.xlu0 0
  %2425 = vperm.xlu0 %2424, %v2407
  %v2426 = vpop.permute.xlu0 %2425
  %2429 = vset.pattern.permute.xlu0 0
  %2430 = vperm.xlu0 %2429, %v2408
  %v2431 = vpop.permute.xlu0 %2430
  %2433 = vset.pattern.permute.xlu0 0
  %2434 = vperm.xlu0 %2433, %v2409
  %v2435 = vpop.permute.xlu0 %2434
  %2437 = vset.pattern.permute.xlu0 0
  %2438 = vperm.xlu0 %2437, %v2410
  %v2439 = vpop.permute.xlu0 %2438
  %2441 = vset.pattern.permute.xlu0 0
  %2442 = vperm.xlu0 %2441, %v2411
  %v2443 = vpop.permute.xlu0 %2442
  %2445 = vset.pattern.permute.xlu0 0
  %2446 = vperm.xlu0 %2445, %v2412
  %v2447 = vpop.permute.xlu0 %2446
  %2449 = vset.pattern.permute.xlu0 0
  %2450 = vperm.xlu0 %2449, %v2413
  %v2451 = vpop.permute.xlu0 %2450
  %2453 = vset.pattern.permute.xlu0 0
  %2454 = vperm.xlu0 %2453, %v2414
  %v2455 = vpop.permute.xlu0 %2454
  %2457 = vset.pattern.permute.xlu0 0
  %2458 = vperm.xlu0 %2457, %v2415
  %v2459 = vpop.permute.xlu0 %2458
  %2461 = vset.pattern.permute.xlu0 0
  %2462 = vperm.xlu0 %2461, %v2416
  %v2463 = vpop.permute.xlu0 %2462
  %2465 = vset.pattern.permute.xlu0 0
  %2466 = vperm.xlu0 %2465, %v2417
  %v2467 = vpop.permute.xlu0 %2466
  %2469 = vset.pattern.permute.xlu0 0
  %2470 = vperm.xlu0 %2469, %v2418
  %v2471 = vpop.permute.xlu0 %2470
  %2473 = vset.pattern.permute.xlu0 0
  %2474 = vperm.xlu0 %2473, %v2419
  %v2475 = vpop.permute.xlu0 %2474
  %2477 = vset.pattern.permute.xlu0 0
  %2478 = vperm.xlu0 %2477, %v2420
  %v2479 = vpop.permute.xlu0 %2478
  %2481 = vset.pattern.permute.xlu0 0
  %2482 = vperm.xlu0 %2481, %v2421
  %v2483 = vpop.permute.xlu0 %2482
  %2485 = vset.pattern.permute.xlu0 0
  %2486 = vperm.xlu0 %2485, %v2422
  %v2487 = vpop.permute.xlu0 %2486
  %v2504 = vunpack.c.l.b16 %v2390
  %v2505 = vunpack.c.l.b16 %v2391
  %v2506 = vunpack.c.l.b16 %v2392
  %v2507 = vunpack.c.l.b16 %v2393
  %v2508 = vunpack.c.l.b16 %v2394
  %v2509 = vunpack.c.l.b16 %v2395
  %v2510 = vunpack.c.l.b16 %v2396
  %v2511 = vunpack.c.l.b16 %v2397
  %v2512 = vunpack.c.l.b16 %v2398
  %v2513 = vunpack.c.l.b16 %v2399
  %v2514 = vunpack.c.l.b16 %v2400
  %v2515 = vunpack.c.l.b16 %v2401
  %v2516 = vunpack.c.l.b16 %v2402
  %v2517 = vunpack.c.l.b16 %v2403
  %v2518 = vunpack.c.l.b16 %v2404
  %v2519 = vunpack.c.l.b16 %v2405
  %v2520 = vpack.c.b16 %v2505, %v2504
  %v2521 = vpack.c.b16 %v2507, %v2506
  %v2522 = vpack.c.b16 %v2509, %v2508
  %v2523 = vpack.c.b16 %v2511, %v2510
  %v2524 = vpack.c.b16 %v2513, %v2512
  %v2525 = vpack.c.b16 %v2515, %v2514
  %v2526 = vpack.c.b16 %v2517, %v2516
  %v2527 = vpack.c.b16 %v2519, %v2518
  %2536 = vmatprep.subr.bf16.mxu0 0
  %2537 = vmatpush1.bf16.msra.mxu0 %v2381
  %2538 = vmatprep.subr.bf16.mxu0 0
  %2539 = vmatpush1.bf16.msra.mxu0 %v2382
  %2540 = vmatprep.subr.bf16.mxu0 0
  %2541 = vmatpush1.bf16.msra.mxu0 %v2383
  %2542 = vmatprep.subr.bf16.mxu0 0
  %2543 = vmatpush1.bf16.msra.mxu0 %v2384
  %2544 = vmatprep.subr.bf16.mxu0 0
  %2545 = vmatpush1.bf16.msra.mxu0 %v2385
  %2546 = vmatprep.subr.bf16.mxu0 0
  %2547 = vmatpush1.bf16.msra.mxu0 %v2386
  %2548 = vmatprep.subr.bf16.mxu0 0
  %2549 = vmatpush1.bf16.msra.mxu0 %v2387
  %2550 = vmatprep.subr.bf16.mxu0 0
  %2551 = vmatpush1.bf16.msra.mxu0 %v2388
  %2552 = vmatprep.subr.bf16.mxu0 0
  %2553 = vmatpush1.bf16.msra.mxu0 0
  %2554 = vmatprep.subr.bf16.mxu0 0
  %2555 = vmatpush1.bf16.msra.mxu0 0
  %2556 = vmatprep.subr.bf16.mxu0 0
  %2557 = vmatpush1.bf16.msra.mxu0 0
  %2558 = vmatprep.subr.bf16.mxu0 0
  %2559 = vmatpush1.bf16.msra.mxu0 0
  %2560 = vmatprep.subr.bf16.mxu0 0
  %2561 = vmatpush1.bf16.msra.mxu0 0
  %2562 = vmatprep.subr.bf16.mxu0 0
  %2563 = vmatpush1.bf16.msra.mxu0 0
  %2564 = vmatprep.subr.bf16.mxu0 0
  %2565 = vmatpush1.bf16.msra.mxu0 0
  %2566 = vmatprep.subr.bf16.mxu0 0
  %2567 = vmatpush1.bf16.msra.mxu0 0
  %2568 = vmatprep.mubr.bf16.mxu0 0
  %2569 = vmatmul.mubr.bf16.gmra.mrb[0].mxu0 %v2520
  %v2570 = vpop.f32.mrb[0].mxu0
  %v2571 = vadd.f32 %v2426, %v2570
  %v2572 = vpop.f32.mrb[0].mxu0
  %v2573 = vpop.f32.mrb[0].mxu0
  %v2574 = vpop.f32.mrb[0].mxu0
  %2575 = vmatprep.mubr.bf16.mxu0 0
  %2576 = vmatmul.mubr.bf16.gmra.mrb[0].mxu0 %v2521
  %v2577 = vpop.f32.mrb[0].mxu0
  %v2578 = vpop.f32.mrb[0].mxu0
  %v2579 = vpop.f32.mrb[0].mxu0
  %v2580 = vpop.f32.mrb[0].mxu0
  %2581 = vmatprep.mubr.bf16.mxu0 0
  %2582 = vmatmul.mubr.bf16.gmra.mrb[0].mxu0 %v2522
  %v2583 = vpop.f32.mrb[0].mxu0
  %v2584 = vpop.f32.mrb[0].mxu0
  %v2585 = vpop.f32.mrb[0].mxu0
  %v2586 = vpop.f32.mrb[0].mxu0
  %2587 = vmatprep.mubr.bf16.mxu0 0
  %2588 = vmatmul.mubr.bf16.gmra.mrb[0].mxu0 %v2523
  %v2589 = vpop.f32.mrb[0].mxu0
  %v2590 = vpop.f32.mrb[0].mxu0
  %v2591 = vpop.f32.mrb[0].mxu0
  %v2592 = vpop.f32.mrb[0].mxu0
  %2593 = vmatprep.mubr.bf16.mxu0 0
  %2594 = vmatmul.mubr.bf16.gmra.mrb[0].mxu0 %v2524
  %v2595 = vpop.f32.mrb[0].mxu0
  %v2596 = vpop.f32.mrb[0].mxu0
  %v2597 = vpop.f32.mrb[0].mxu0
  %v2598 = vpop.f32.mrb[0].mxu0
  %2599 = vmatprep.mubr.bf16.mxu0 0
  %2600 = vmatmul.mubr.bf16.gmra.mrb[0].mxu0 %v2525
  %v2601 = vpop.f32.mrb[0].mxu0
  %v2602 = vpop.f32.mrb[0].mxu0
  %v2603 = vpop.f32.mrb[0].mxu0
  %v2604 = vpop.f32.mrb[0].mxu0
  %2605 = vmatprep.mubr.bf16.mxu0 0
  %2606 = vmatmul.mubr.bf16.gmra.mrb[0].mxu0 %v2526
  %v2607 = vpop.f32.mrb[0].mxu0
  %v2608 = vpop.f32.mrb[0].mxu0
  %v2609 = vpop.f32.mrb[0].mxu0
  %v2610 = vpop.f32.mrb[0].mxu0
  %2611 = vmatprep.mubr.bf16.mxu0 0
  %2612 = vmatmul.mubr.bf16.gmra.mrb[0].mxu0 %v2527
  %v2613 = vpop.f32.mrb[0].mxu0
  %v2614 = vpop.f32.mrb[0].mxu0
  %v2615 = vpop.f32.mrb[0].mxu0
  %v2616 = vpop.f32.mrb[0].mxu0
  %2617 = vdwg.mxu0
  %2618 = vst [vmem:[%s4] sm:$0x7] %v2571
  // Predicated region
  $region18: #{softmesh_forward.1} parent=0 // pred_check
    _
  $region19: #{softmesh_forward.1} parent=0 // pred_check_branch
    %2620 = sbr.rel (0) target = $region21
  $region20: #{softmesh_forward.1} parent=0 // pred_region
    _
  $region21: #{softmesh_forward.1} parent=0 // pred_fallthru
    _
  // Predicated region
  $region22: #{softmesh_forward.1} parent=0 // pred_check
    _
  $region23: #{softmesh_forward.1} parent=0 // pred_check_branch
    %2622 = sbr.rel (0) target = $region25
  $region24: #{softmesh_forward.1} parent=0 // pred_region
    _
  $region25: #{softmesh_forward.1} parent=0 // pred_fallthru
    _

</llo_original>
